<compile_context>
chip_gen: v5e
topology: v5e:2x2
jax: 0.10.0
libtpu: 0.0.40
codegen_flags: <defaults>
</compile_context>

<pallas_src>
import jax
import jax.numpy as jnp
from jax.experimental import pallas as pl
from jax.experimental.pallas import tpu as pltpu


# ----------------------------- Pallas kernel -------------------------------

def _deconv_mm_kernel(x_ref, w_ref, b_ref, o_ref):
    # x_ref: (Cin, TN) bf16   w_ref: (8*Co, Cin) bf16
    # b_ref: (8*Co, 1) f32    o_ref: (8*Co, TN) f32
    y = jnp.dot(w_ref[...], x_ref[...], preferred_element_type=jnp.float32)
    o_ref[...] = jnp.maximum(y + b_ref[...], 0.0).astype(o_ref.dtype)


def _pick_tile(n, cap=2048):
    """Largest multiple-of-128 divisor of n that is <= cap, else n (full dim).

    Keeps the lane dim of every block either 128-aligned or full-extent, and
    bounds the double-buffered VMEM footprint to ~a few MiB on all TPU gens
    (v5e/v6e/v7x)."""
    best = None
    t = 128
    while t <= min(n, cap):
        if n % t == 0:
            best = t
        t += 128
    return best if best is not None else n


def deconv2x2x2_relu(x_ncdhw, w_pt, bias):
    """ConvTranspose3d(k=2, s=2, p=0) + ReLU.

    x_ncdhw: (B, Cin, D, H, W) f32
    w_pt:    (Cin, Cout, 2, 2, 2) f32  (PyTorch ConvTranspose3d layout)
    bias:    (Cout,) f32
    returns: (B, Cout, 2D, 2H, 2W) f32
    """
    B, Ci, D, H, W = x_ncdhw.shape
    Co = w_pt.shape[1]
    N = D * H * W
    K8 = 8 * Co

    # Weight matrix, rows ordered (cout, kd, kh, kw); bf16 for the MXU.
    wm = jnp.transpose(w_pt, (1, 2, 3, 4, 0)).reshape(K8, Ci).astype(jnp.bfloat16)
    # Bias expanded to one f32 column per output row (hoisted out of the kernel).
    b_col = jnp.repeat(bias, 8).reshape(K8, 1).astype(jnp.float32)
    # Free reshape (row-major): spatial dim becomes the lane dimension.
    x_flat = x_ncdhw.reshape(B, Ci, N).astype(jnp.bfloat16)

    TN = _pick_tile(N)
    y = pl.pallas_call(
        _deconv_mm_kernel,
        out_shape=jax.ShapeDtypeStruct((B, K8, N), jnp.float32),
        grid=(B, N // TN),
        in_specs=[
            pl.BlockSpec((None, Ci, TN), lambda b, j: (b, 0, j)),  # x row tile
            pl.BlockSpec((K8, Ci), lambda b, j: (0, 0)),           # weights (resident)
            pl.BlockSpec((K8, 1), lambda b, j: (0, 0)),            # bias    (resident)
        ],
        out_specs=pl.BlockSpec((None, K8, TN), lambda b, j: (b, 0, j)),
        compiler_params=pltpu.CompilerParams(
            dimension_semantics=("parallel", "parallel")),
    )(x_flat, wm, b_col)

    # De-interleave the 8 sub-positions: (B, 8Co, N) -> (B, Co, 2D, 2H, 2W).
    y = y.reshape(B, Co, 2, 2, 2, D, H, W)
    y = jnp.transpose(y, (0, 1, 5, 2, 6, 3, 7, 4))
    return y.reshape(B, Co, 2 * D, 2 * H, 2 * W)


# --------------------------- pure-JAX reference ------------------------------

def deconv2x2x2_relu_reference(x_ncdhw, w_pt, bias):
    """Same math (including the bf16 input rounding) via einsum, for checking."""
    B, Ci, D, H, W = x_ncdhw.shape
    Co = w_pt.shape[1]
    N = D * H * W
    K8 = 8 * Co
    wm = jnp.transpose(w_pt, (1, 2, 3, 4, 0)).reshape(K8, Ci)
    wm = wm.astype(jnp.bfloat16).astype(jnp.float32)
    xf = x_ncdhw.reshape(B, Ci, N).astype(jnp.bfloat16).astype(jnp.float32)
    b_col = jnp.repeat(bias, 8).reshape(K8, 1).astype(jnp.float32)
    y = jnp.einsum("kc,bcn->bkn", wm, xf, preferred_element_type=jnp.float32)
    y = jnp.maximum(y + b_col[None], 0.0)
    y = y.reshape(B, Co, 2, 2, 2, D, H, W)
    y = jnp.transpose(y, (0, 1, 5, 2, 6, 3, 7, 4))
    return y.reshape(B, Co, 2 * D, 2 * H, 2 * W)


# --------------------------------- main --------------------------------------

if __name__ == "__main__":
    B = 2
    n_filters_in = 32
    n_filters_out = 16   # -> 8*Cout = 128: lane-dense MXU output rows
    S = 16               # input spatial resolution (D = H = W = S)

    key = jax.random.PRNGKey(0)
    kx, kw, kb = jax.random.split(key, 3)

    x = jax.random.normal(kx, (B, n_filters_in, S, S, S), jnp.float32)
    fan_in = n_filters_in * 8
    w = (jax.random.normal(kw, (n_filters_in, n_filters_out, 2, 2, 2), jnp.float32)
         / jnp.sqrt(jnp.float32(fan_in)))
    b = 0.01 * jax.random.normal(kb, (n_filters_out,), jnp.float32)

    fwd = jax.jit(deconv2x2x2_relu)
    out = fwd(x, w, b)
    jax.block_until_ready(out)

    assert out.shape == (B, n_filters_out, 2 * S, 2 * S, 2 * S), out.shape
    assert bool(jnp.all(jnp.isfinite(out)))

    ref = jax.jit(deconv2x2x2_relu_reference)(x, w, b)
    jax.block_until_ready(ref)
    assert bool(jnp.allclose(out, ref, rtol=1e-3, atol=1e-3)), (
        float(jnp.max(jnp.abs(out - ref))))

    print("KERNEL_OK")
</pallas_src>

<mosaic_0001>
module attributes {stable_mosaic.version = 11 : i64} {
  func.func @_deconv_mm_kernel(%arg0: i32, %arg1: i32, %arg2: memref<1x32x2048xbf16, #tpu.memory_space<vmem>>, %arg3: memref<128x32xbf16, #tpu.memory_space<vmem>>, %arg4: memref<128x1xf32, #tpu.memory_space<vmem>>, %arg5: memref<1x128x2048xf32, #tpu.memory_space<vmem>>) attributes {dimension_semantics = [#tpu.dimension_semantics<parallel>, #tpu.dimension_semantics<parallel>], iteration_bounds = array<i64: 2, 2>, scalar_prefetch = 0 : i64, scratch_operands = 0 : i64, tpu.core_type = #tpu.core_type<tc>, window_params = [{transform_indices = @transform_0, window_bounds = array<i64: 1, 32, 2048>}, {pipeline_mode = #tpu.pipeline_mode<synchronous>, transform_indices = @transform_1, window_bounds = array<i64: 128, 32>}, {pipeline_mode = #tpu.pipeline_mode<synchronous>, transform_indices = @transform_2, window_bounds = array<i64: 128, 1>}, {transform_indices = @transform_3, window_bounds = array<i64: 1, 128, 2048>}]} {
    %c0 = arith.constant 0 : index
    %c0_0 = arith.constant 0 : index
    %0 = vector.load %arg3[%c0, %c0_0] : memref<128x32xbf16, #tpu.memory_space<vmem>>, vector<128x32xbf16>
    %c0_1 = arith.constant 0 : index
    %c0_2 = arith.constant 0 : index
    %c0_3 = arith.constant 0 : index
    %1 = vector.load %arg2[%c0_1, %c0_2, %c0_3] : memref<1x32x2048xbf16, #tpu.memory_space<vmem>>, vector<1x32x2048xbf16>
    %2 = vector.shape_cast %1 : vector<1x32x2048xbf16> to vector<32x2048xbf16>
    %cst = arith.constant dense<0.000000e+00> : vector<128x2048xf32>
    %3 = tpu.matmul %0, %2, %cst {dimension_numbers = #tpu.dot_dimension_numbers<[1], [0], [0], [1], [0, 0, 1, 1], [], []>} : vector<128x32xbf16>, vector<32x2048xbf16>, vector<128x2048xf32> -> vector<128x2048xf32>
    %c0_4 = arith.constant 0 : index
    %c0_5 = arith.constant 0 : index
    %4 = vector.load %arg4[%c0_4, %c0_5] : memref<128x1xf32, #tpu.memory_space<vmem>>, vector<128x1xf32>
    %5 = vector.broadcast %4 : vector<128x1xf32> to vector<128x2048xf32>
    %6 = arith.addf %3, %5 : vector<128x2048xf32>
    %cst_6 = arith.constant 0.000000e+00 : f32
    %7 = vector.broadcast %cst_6 : f32 to vector<128x2048xf32>
    %8 = arith.maximumf %6, %7 : vector<128x2048xf32>
    %c0_7 = arith.constant 0 : index
    %c0_8 = arith.constant 0 : index
    %c0_9 = arith.constant 0 : index
    %9 = vector.load %arg5[%c0_7, %c0_8, %c0_9] : memref<1x128x2048xf32, #tpu.memory_space<vmem>>, vector<1x128x2048xf32>
    %10 = vector.shape_cast %9 : vector<1x128x2048xf32> to vector<128x2048xf32>
    %11 = vector.shape_cast %8 : vector<128x2048xf32> to vector<1x128x2048xf32>
    tpu.vector_store %arg5[%c0_7, %c0_8, %c0_9], %11 {strides = array<i32>} : memref<1x128x2048xf32, #tpu.memory_space<vmem>>, vector<1x128x2048xf32>,
    return
  }
  func.func @transform_0(%arg0: i32, %arg1: i32) -> (i32, i32, i32) {
    %c0_i32 = arith.constant 0 : i32
    %c0_i32_0 = arith.constant 0 : i32
    return %arg0, %c0_i32, %arg1 : i32, i32, i32
  }
  func.func @transform_1(%arg0: i32, %arg1: i32) -> (i32, i32) {
    %c0_i32 = arith.constant 0 : i32
    %c0_i32_0 = arith.constant 0 : i32
    %c0_i32_1 = arith.constant 0 : i32
    return %c0_i32, %c0_i32_0 : i32, i32
  }
  func.func @transform_2(%arg0: i32, %arg1: i32) -> (i32, i32) {
    %c0_i32 = arith.constant 0 : i32
    %c0_i32_0 = arith.constant 0 : i32
    %c0_i32_1 = arith.constant 0 : i32
    return %c0_i32, %c0_i32_0 : i32, i32
  }
  func.func @transform_3(%arg0: i32, %arg1: i32) -> (i32, i32, i32) {
    %c0_i32 = arith.constant 0 : i32
    %c0_i32_0 = arith.constant 0 : i32
    return %arg0, %c0_i32, %arg1 : i32, i32, i32
  }
}

</mosaic_0001>

<llo_original>
// kernel: deconv2x2x2_relu.1
$region0: #{deconv2x2x2_relu.1}
  #allocation0 [shape = 'u32[]', space=smem, size = 0x4, offset = 0x4, fixed_abs, tag = 'smem constant byte address 0x4 - core index']
  #allocation1 [shape = 'u32[72,128]{1,0:T(1,128)}', space=vmem, size = 0x9000, scoped, tag = 'internal scratch']
  %s0 = inlined_call_operand.vmem [shape: bf16[2,32,4096], index: 0, kind: input, shape index: {}]
  %s1 = inlined_call_operand.vmem [shape: bf16[128,32], index: 1, kind: input, shape index: {}]
  %s2 = inlined_call_operand.vmem [shape: f32[128,1], index: 2, kind: input, shape index: {}]
  %s3 = inlined_call_operand.vmem [shape: f32[2,128,4096], index: 3, kind: output, shape index: {}]
  %s4 = sld [smem:[#allocation0]]
  $region87: #{deconv2x2x2_relu.1} parent=0
    _
  %s6 = ssub.s32 1, %s4
  %s7 = scalar_select 0, %s6, %s4
  $region1: #{deconv2x2x2_relu.1} parent=0
    #allocation2 [shape = 'u8[262144]{0}', space=vmem, size = 0x40000, scoped, tag = 'input window, operand 0']
    #allocation3 [shape = 'u8[2097152]{0}', space=vmem, size = 0x200000, scoped, tag = 'output window, operand 0']
    loop: start=0, step=1, limit=6
    $region2: #{deconv2x2x2_relu.1} parent=1 // loop_pre_header
      _
    $region3: #{deconv2x2x2_relu.1} parent=1 // loop_header
      %s9 = sphi 0, %s13
      %p10 = scmp.ge.s32.totalorder %s9, 6
      %s16 = sphi 0, %s28
      %s17 = sphi 0, %s24
      %s18 = sphi 0, %s16
      %s19 = sphi 0, %s17
      %s20 = sphi 0, %s18
      %s21 = sphi 0, %s19
      %s33 = sphi 0, %s35
      %s36 = sphi 0, %s33
      %s37 = sphi 0, %s36
      %s53 = sphi 0, %s37
      %s57 = sphi 0, %s57
      %s59 = sphi 0, %s57
      %s60 = sphi 0, %s59
      %s74 = sphi 0, %s60
      %s78 = sphi 0, %s78
      %s80 = sphi 0, %s78
      %s81 = sphi 0, %s80
      %s95 = sphi 0, %s81
      %s103 = sphi 0, %s105
      %s106 = sphi 0, %s103
      %s107 = sphi 0, %s106
      %s123 = sphi 0, %s107
    $region4: #{deconv2x2x2_relu.1} parent=1 // loop_header_branch
      %12 = sbr.rel (%p10) target = $region8
    $region5: #{deconv2x2x2_relu.1} parent=1 // loop_body
      %s14 = ssub.s32 %s9, 1
      %s15 = ssub.s32 %s9, 2
      %s22 = sadd.s32 1, %s17
      %p23 = scmp.ge.s32.totalorder %s22, 2
      %s24 = scalar_select %p23, 0, %s22
      %s25 = sadd.s32 1, %s16
      %s26 = scalar_select %p23, %s25, %s16
      %p27 = scmp.ge.s32.totalorder %s26, 2
      %s28 = scalar_select %p27, 0, %s26
      %s29 = ssub.s32 %s16, %s28
      %s30 = ssub.s32 %s17, %s24
      %s31 = sor.u32 %s29, %s30
      %p32 = scmp.eq.s32.totalorder %s31, 0
      %s34 = sadd.s32 %s33, 1
      %s35 = scalar_select %p32, %s33, %s34
      %p38 = pneg %p32
      %p39 = scmp.eq.s32.totalorder %s9, 3
      %p40 = por %p38, %p39
      %p41 = scmp.ne.s32.totalorder %s33, %s36
      %p42 = scmp.eq.s32.totalorder %s9, 0
      %p43 = por %p41, %p42
      %p44 = scmp.ne.s32.totalorder %s33, %s36
      %p45 = scmp.eq.s32.totalorder %s14, 3
      %p46 = por %p44, %p45
      %p47 = scmp.ne.s32.totalorder %s36, %s37
      %p48 = scmp.eq.s32.totalorder %s14, 0
      %p49 = por %p47, %p48
      %p50 = scmp.ne.s32.totalorder %s36, %s37
      %p51 = scmp.eq.s32.totalorder %s15, 3
      %p52 = por %p50, %p51
      %p54 = scmp.ne.s32.totalorder %s37, %s53
      %p55 = scmp.eq.s32.totalorder %s15, 0
      %p56 = por %p54, %p55
      %s58 = sadd.s32 %s57, 1
      %p61 = scmp.eq.s32.totalorder %s9, 3
      %p62 = scmp.ne.s32.totalorder %s57, %s59
      %p63 = scmp.eq.s32.totalorder %s9, 0
      %p64 = por %p62, %p63
      %p65 = scmp.ne.s32.totalorder %s57, %s59
      %p66 = scmp.eq.s32.totalorder %s14, 3
      %p67 = por %p65, %p66
      %p68 = scmp.ne.s32.totalorder %s59, %s60
      %p69 = scmp.eq.s32.totalorder %s14, 0
      %p70 = por %p68, %p69
      %p71 = scmp.ne.s32.totalorder %s59, %s60
      %p72 = scmp.eq.s32.totalorder %s15, 3
      %p73 = por %p71, %p72
      %p75 = scmp.ne.s32.totalorder %s60, %s74
      %p76 = scmp.eq.s32.totalorder %s15, 0
      %p77 = por %p75, %p76
      %s79 = sadd.s32 %s78, 1
      %p82 = scmp.eq.s32.totalorder %s9, 3
      %p83 = scmp.ne.s32.totalorder %s78, %s80
      %p84 = scmp.eq.s32.totalorder %s9, 0
      %p85 = por %p83, %p84
      %p86 = scmp.ne.s32.totalorder %s78, %s80
      %p87 = scmp.eq.s32.totalorder %s14, 3
      %p88 = por %p86, %p87
      %p89 = scmp.ne.s32.totalorder %s80, %s81
      %p90 = scmp.eq.s32.totalorder %s14, 0
      %p91 = por %p89, %p90
      %p92 = scmp.ne.s32.totalorder %s80, %s81
      %p93 = scmp.eq.s32.totalorder %s15, 3
      %p94 = por %p92, %p93
      %p96 = scmp.ne.s32.totalorder %s81, %s95
      %p97 = scmp.eq.s32.totalorder %s15, 0
      %p98 = por %p96, %p97
      %s99 = ssub.s32 %s16, %s28
      %s100 = ssub.s32 %s17, %s24
      %s101 = sor.u32 %s99, %s100
      %p102 = scmp.eq.s32.totalorder %s101, 0
      %s104 = sadd.s32 %s103, 1
      %s105 = scalar_select %p102, %s103, %s104
      %p108 = pneg %p102
      %p109 = scmp.eq.s32.totalorder %s9, 3
      %p110 = por %p108, %p109
      %p111 = scmp.ne.s32.totalorder %s103, %s106
      %p112 = scmp.eq.s32.totalorder %s9, 0
      %p113 = por %p111, %p112
      %p114 = scmp.ne.s32.totalorder %s103, %s106
      %p115 = scmp.eq.s32.totalorder %s14, 3
      %p116 = por %p114, %p115
      %p117 = scmp.ne.s32.totalorder %s106, %s107
      %p118 = scmp.eq.s32.totalorder %s14, 0
      %p119 = por %p117, %p118
      %p120 = scmp.ne.s32.totalorder %s106, %s107
      %p121 = scmp.eq.s32.totalorder %s15, 3
      %p122 = por %p120, %p121
      %p124 = scmp.ne.s32.totalorder %s107, %s123
      %p125 = scmp.eq.s32.totalorder %s15, 0
      %p126 = por %p124, %p125
      %p127 = scmp.le.s32.totalorder 1, %s9
      %p128 = scmp.lt.s32.totalorder %s9, 5
      %p129 = pnand %p127, %p128
      %p130 = pneg %p129
      // Predicated region
      $region9: #{deconv2x2x2_relu.1} parent=5 // pred_check
        _
      $region10: #{deconv2x2x2_relu.1} parent=5 // pred_check_branch
        %132 = sbr.rel (%p129) target = $region12
      $region11: #{deconv2x2x2_relu.1} parent=5 // pred_region
        %s133 = ssub.s32 %s9, 1
        // Predicated region
        $region13: #{deconv2x2x2_relu.1} parent=11 // pred_check
          %p134 = pneg %p70
        $region14: #{deconv2x2x2_relu.1} parent=11 // pred_check_branch
          %136 = sbr.rel (%p134) target = $region16
        $region15: #{deconv2x2x2_relu.1} parent=11 // pred_region
          _
        $region16: #{deconv2x2x2_relu.1} parent=11 // pred_fallthru
          _
        // Predicated region
        $region17: #{deconv2x2x2_relu.1} parent=11 // pred_check
          %p137 = pneg %p91
        $region18: #{deconv2x2x2_relu.1} parent=11 // pred_check_branch
          %139 = sbr.rel (%p137) target = $region20
        $region19: #{deconv2x2x2_relu.1} parent=11 // pred_region
          _
        $region20: #{deconv2x2x2_relu.1} parent=11 // pred_fallthru
          _
      $region12: #{deconv2x2x2_relu.1} parent=5 // pred_fallthru
        _
      %p140 = scmp.lt.s32.totalorder %s9, 4
      // Predicated region
      $region21: #{deconv2x2x2_relu.1} parent=5 // pred_check
        %p141 = pneg %p140
      $region22: #{deconv2x2x2_relu.1} parent=5 // pred_check_branch
        %143 = sbr.rel (%p141) target = $region24
      $region23: #{deconv2x2x2_relu.1} parent=5 // pred_region
        // Predicated region
        $region25: #{deconv2x2x2_relu.1} parent=23 // pred_check
          %p144 = pneg %p43
        $region26: #{deconv2x2x2_relu.1} parent=23 // pred_check_branch
          %146 = sbr.rel (%p144) target = $region28
        $region27: #{deconv2x2x2_relu.1} parent=23 // pred_region
          %s147 = sand.u32 %s33, 1
          %s148 = sand.u32 %s33, 1
          %s149 = smul.addr %s148, 256
          %s150 = scalar_lea.vmem [#allocation2], %s149
          %s151 = smul.u32 16, %s17
          %s152 = smul.addr %s16, 128
          %s153 = sadd.s32 %s151, %s152
          %s154 = smul.addr %s153, 4
          %s155 = scalar_lea.vmem %s0, %s154
          // Predicated region
          $region29: #{deconv2x2x2_relu.1} parent=27 // pred_check
            _
          $region30: #{deconv2x2x2_relu.1} parent=27 // pred_check_branch
            %157 = sbr.rel (0) target = $region32
          $region31: #{deconv2x2x2_relu.1} parent=27 // pred_region
            // Predicated region
            $region33: #{deconv2x2x2_relu.1} parent=31 // pred_check
              _
            $region34: #{deconv2x2x2_relu.1} parent=31 // pred_check_branch
              %159 = sbr.rel (0) target = $region36
            $region35: #{deconv2x2x2_relu.1} parent=31 // pred_region
              loop: start=0, step=1, limit=1
              $region37: #{deconv2x2x2_relu.1} parent=35 // loop_pre_header
                _
              $region38: #{deconv2x2x2_relu.1} parent=35 // loop_header
                %s161 = sphi 0, %s165
                %p162 = scmp.ge.s32.totalorder %s161, 1
                %s166 = sphi %s155, %s155
                %s167 = sphi %s150, %s150
              $region39: #{deconv2x2x2_relu.1} parent=35 // loop_header_branch
                %164 = sbr.rel (%p162) target = $region43
              $region40: #{deconv2x2x2_relu.1} parent=35 // loop_body
                %v168 = vld [vmem:[%s166] sm:$0xff]
                %169 = vst [vmem:[%s167] sm:$0xff] %v168
                %v170 = vld [vmem:[%s166 + $0x8] sm:$0xff]
                %171 = vst [vmem:[%s167 + $0x8] sm:$0xff] %v170
                %v172 = vld [vmem:[%s166 + $0x10] sm:$0xff]
                %173 = vst [vmem:[%s167 + $0x10] sm:$0xff] %v172
                %v174 = vld [vmem:[%s166 + $0x18] sm:$0xff]
                %175 = vst [vmem:[%s167 + $0x18] sm:$0xff] %v174
                %v176 = vld [vmem:[%s166 + $0x20] sm:$0xff]
                %177 = vst [vmem:[%s167 + $0x20] sm:$0xff] %v176
                %v178 = vld [vmem:[%s166 + $0x28] sm:$0xff]
                %179 = vst [vmem:[%s167 + $0x28] sm:$0xff] %v178
                %v180 = vld [vmem:[%s166 + $0x30] sm:$0xff]
                %181 = vst [vmem:[%s167 + $0x30] sm:$0xff] %v180
                %v182 = vld [vmem:[%s166 + $0x38] sm:$0xff]
                %183 = vst [vmem:[%s167 + $0x38] sm:$0xff] %v182
                %v184 = vld [vmem:[%s166 + $0x80] sm:$0xff]
                %185 = vst [vmem:[%s167 + $0x40] sm:$0xff] %v184
                %v186 = vld [vmem:[%s166 + $0x88] sm:$0xff]
                %187 = vst [vmem:[%s167 + $0x48] sm:$0xff] %v186
                %v188 = vld [vmem:[%s166 + $0x90] sm:$0xff]
                %189 = vst [vmem:[%s167 + $0x50] sm:$0xff] %v188
                %v190 = vld [vmem:[%s166 + $0x98] sm:$0xff]
                %191 = vst [vmem:[%s167 + $0x58] sm:$0xff] %v190
                %v192 = vld [vmem:[%s166 + $0xa0] sm:$0xff]
                %193 = vst [vmem:[%s167 + $0x60] sm:$0xff] %v192
                %v194 = vld [vmem:[%s166 + $0xa8] sm:$0xff]
                %195 = vst [vmem:[%s167 + $0x68] sm:$0xff] %v194
                %v196 = vld [vmem:[%s166 + $0xb0] sm:$0xff]
                %197 = vst [vmem:[%s167 + $0x70] sm:$0xff] %v196
                %v198 = vld [vmem:[%s166 + $0xb8] sm:$0xff]
                %199 = vst [vmem:[%s167 + $0x78] sm:$0xff] %v198
                %v200 = vld [vmem:[%s166 + $0x100] sm:$0xff]
                %201 = vst [vmem:[%s167 + $0x80] sm:$0xff] %v200
                %v202 = vld [vmem:[%s166 + $0x108] sm:$0xff]
                %203 = vst [vmem:[%s167 + $0x88] sm:$0xff] %v202
                %v204 = vld [vmem:[%s166 + $0x110] sm:$0xff]
                %205 = vst [vmem:[%s167 + $0x90] sm:$0xff] %v204
                %v206 = vld [vmem:[%s166 + $0x118] sm:$0xff]
                %207 = vst [vmem:[%s167 + $0x98] sm:$0xff] %v206
                %v208 = vld [vmem:[%s166 + $0x120] sm:$0xff]
                %209 = vst [vmem:[%s167 + $0xa0] sm:$0xff] %v208
                %v210 = vld [vmem:[%s166 + $0x128] sm:$0xff]
                %211 = vst [vmem:[%s167 + $0xa8] sm:$0xff] %v210
                %v212 = vld [vmem:[%s166 + $0x130] sm:$0xff]
                %213 = vst [vmem:[%s167 + $0xb0] sm:$0xff] %v212
                %v214 = vld [vmem:[%s166 + $0x138] sm:$0xff]
                %215 = vst [vmem:[%s167 + $0xb8] sm:$0xff] %v214
                %v216 = vld [vmem:[%s166 + $0x180] sm:$0xff]
                %217 = vst [vmem:[%s167 + $0xc0] sm:$0xff] %v216
                %v218 = vld [vmem:[%s166 + $0x188] sm:$0xff]
                %219 = vst [vmem:[%s167 + $0xc8] sm:$0xff] %v218
                %v220 = vld [vmem:[%s166 + $0x190] sm:$0xff]
                %221 = vst [vmem:[%s167 + $0xd0] sm:$0xff] %v220
                %v222 = vld [vmem:[%s166 + $0x198] sm:$0xff]
                %223 = vst [vmem:[%s167 + $0xd8] sm:$0xff] %v222
                %v224 = vld [vmem:[%s166 + $0x1a0] sm:$0xff]
                %225 = vst [vmem:[%s167 + $0xe0] sm:$0xff] %v224
                %v226 = vld [vmem:[%s166 + $0x1a8] sm:$0xff]
                %227 = vst [vmem:[%s167 + $0xe8] sm:$0xff] %v226
                %v228 = vld [vmem:[%s166 + $0x1b0] sm:$0xff]
                %229 = vst [vmem:[%s167 + $0xf0] sm:$0xff] %v228
                %v230 = vld [vmem:[%s166 + $0x1b8] sm:$0xff]
                %231 = vst [vmem:[%s167 + $0xf8] sm:$0xff] %v230
              $region41: #{deconv2x2x2_relu.1} parent=35 // loop_footer
                %s165 = sadd.s32 1, %s161
              $region42: #{deconv2x2x2_relu.1} parent=35 // loop_footer_branch
                %160 = sbr.rel target = $region38
              $region43: #{deconv2x2x2_relu.1} parent=35 // loop_exit
                _
            $region36: #{deconv2x2x2_relu.1} parent=31 // pred_fallthru
              _
            // Predicated region
            $region44: #{deconv2x2x2_relu.1} parent=31 // pred_check
              _
            $region45: #{deconv2x2x2_relu.1} parent=31 // pred_check_branch
              %233 = sbr.rel target = $region47
            $region46: #{deconv2x2x2_relu.1} parent=31 // pred_region
              _
            $region47: #{deconv2x2x2_relu.1} parent=31 // pred_fallthru
              _
          $region32: #{deconv2x2x2_relu.1} parent=27 // pred_fallthru
            _
          %234 = vnop
        $region28: #{deconv2x2x2_relu.1} parent=23 // pred_fallthru
          _
      $region24: #{deconv2x2x2_relu.1} parent=5 // pred_fallthru
        _
      %p235 = scmp.le.s32.totalorder 1, %s9
      %p236 = scmp.lt.s32.totalorder %s9, 5
      %p237 = pnand %p235, %p236
      %p238 = pneg %p237
      // Predicated region
      $region48: #{deconv2x2x2_relu.1} parent=5 // pred_check
        _
      $region49: #{deconv2x2x2_relu.1} parent=5 // pred_check_branch
        %240 = sbr.rel (%p237) target = $region51
      $region50: #{deconv2x2x2_relu.1} parent=5 // pred_region
        %s241 = ssub.s32 %s9, 1
        %s242 = sand.u32 %s36, 1
        %s243 = sand.u32 %s36, 1
        %s244 = smul.addr %s243, 256
        %s245 = scalar_lea.vmem [#allocation2], %s244
        // Predicated region
        $region52: #{deconv2x2x2_relu.1} parent=50 // pred_check
          %p246 = pneg %p49
        $region53: #{deconv2x2x2_relu.1} parent=50 // pred_check_branch
          %248 = sbr.rel (%p246) target = $region55
        $region54: #{deconv2x2x2_relu.1} parent=50 // pred_region
          _
        $region55: #{deconv2x2x2_relu.1} parent=50 // pred_fallthru
          _
        %s249 = sand.u32 %s36, 1
        %s250 = sand.u32 %s36, 1
        %s251 = smul.addr %s250, 256
        %s252 = scalar_lea.vmem [#allocation2], %s251
        %p253 = pneg %p49
        %p254 = pneg %p46
        %p255 = pneg %p70
        %p256 = pneg %p67
        %p257 = pneg %p91
        %p258 = pneg %p88
        %p259 = pneg %p119
        %p260 = pneg %p116
        %s261 = sand.u32 %s106, 1
        %s262 = sand.u32 %s106, 1
        %s263 = smul.addr %s262, 2048
        %s264 = scalar_lea.vmem [#allocation3], %s263
        %s265 = smul.u32 16, %s19
        %s266 = smul.u32 16, %s19
        %v268 = vld [vmem:[%s1] sm:$0xf]
        %v269 = vld [vmem:[%s1 + $0x4] sm:$0xf]
        %v270 = vld [vmem:[%s1 + $0x8] sm:$0xf]
        %v271 = vld [vmem:[%s1 + $0xc] sm:$0xf]
        %v272 = vld [vmem:[%s1 + $0x10] sm:$0xf]
        %v273 = vld [vmem:[%s1 + $0x14] sm:$0xf]
        %v274 = vld [vmem:[%s1 + $0x18] sm:$0xf]
        %v275 = vld [vmem:[%s1 + $0x1c] sm:$0xf]
        %v276 = vld [vmem:[%s1 + $0x20] sm:$0xf]
        %v277 = vld [vmem:[%s1 + $0x24] sm:$0xf]
        %v278 = vld [vmem:[%s1 + $0x28] sm:$0xf]
        %v279 = vld [vmem:[%s1 + $0x2c] sm:$0xf]
        %v280 = vld [vmem:[%s1 + $0x30] sm:$0xf]
        %v281 = vld [vmem:[%s1 + $0x34] sm:$0xf]
        %v282 = vld [vmem:[%s1 + $0x38] sm:$0xf]
        %v283 = vld [vmem:[%s1 + $0x3c] sm:$0xf]
        %v284 = vld [vmem:[%s245] sm:$0xff]
        %v285 = vld [vmem:[%s245 + $0x8] sm:$0xff]
        %v286 = vld [vmem:[%s245 + $0x10] sm:$0xff]
        %v287 = vld [vmem:[%s245 + $0x18] sm:$0xff]
        %v288 = vld [vmem:[%s245 + $0x20] sm:$0xff]
        %v289 = vld [vmem:[%s245 + $0x28] sm:$0xff]
        %v290 = vld [vmem:[%s245 + $0x30] sm:$0xff]
        %v291 = vld [vmem:[%s245 + $0x38] sm:$0xff]
        %v292 = vld [vmem:[%s245 + $0x40] sm:$0xff]
        %v293 = vld [vmem:[%s245 + $0x48] sm:$0xff]
        %v294 = vld [vmem:[%s245 + $0x50] sm:$0xff]
        %v295 = vld [vmem:[%s245 + $0x58] sm:$0xff]
        %v296 = vld [vmem:[%s245 + $0x60] sm:$0xff]
        %v297 = vld [vmem:[%s245 + $0x68] sm:$0xff]
        %v298 = vld [vmem:[%s245 + $0x70] sm:$0xff]
        %v299 = vld [vmem:[%s245 + $0x78] sm:$0xff]
        %v300 = vld [vmem:[%s245 + $0x80] sm:$0xff]
        %v301 = vld [vmem:[%s245 + $0x88] sm:$0xff]
        %v302 = vld [vmem:[%s245 + $0x90] sm:$0xff]
        %v303 = vld [vmem:[%s245 + $0x98] sm:$0xff]
        %v304 = vld [vmem:[%s245 + $0xa0] sm:$0xff]
        %v305 = vld [vmem:[%s245 + $0xa8] sm:$0xff]
        %v306 = vld [vmem:[%s245 + $0xb0] sm:$0xff]
        %v307 = vld [vmem:[%s245 + $0xb8] sm:$0xff]
        %v308 = vld [vmem:[%s245 + $0xc0] sm:$0xff]
        %v309 = vld [vmem:[%s245 + $0xc8] sm:$0xff]
        %v310 = vld [vmem:[%s245 + $0xd0] sm:$0xff]
        %v311 = vld [vmem:[%s245 + $0xd8] sm:$0xff]
        %v312 = vld [vmem:[%s245 + $0xe0] sm:$0xff]
        %v313 = vld [vmem:[%s245 + $0xe8] sm:$0xff]
        %v314 = vld [vmem:[%s245 + $0xf0] sm:$0xff]
        %v315 = vld [vmem:[%s245 + $0xf8] sm:$0xff]
        %v316 = vld [vmem:[%s2] sm:$0xff]
        %v317 = vld [vmem:[%s2 + $0x8] sm:$0xff]
        %v318 = vld [vmem:[%s2 + $0x10] sm:$0xff]
        %v319 = vld [vmem:[%s2 + $0x18] sm:$0xff]
        %v320 = vld [vmem:[%s2 + $0x20] sm:$0xff]
        %v321 = vld [vmem:[%s2 + $0x28] sm:$0xff]
        %v322 = vld [vmem:[%s2 + $0x30] sm:$0xff]
        %v323 = vld [vmem:[%s2 + $0x38] sm:$0xff]
        %v324 = vld [vmem:[%s2 + $0x40] sm:$0xff]
        %v325 = vld [vmem:[%s2 + $0x48] sm:$0xff]
        %v326 = vld [vmem:[%s2 + $0x50] sm:$0xff]
        %v327 = vld [vmem:[%s2 + $0x58] sm:$0xff]
        %v328 = vld [vmem:[%s2 + $0x60] sm:$0xff]
        %v329 = vld [vmem:[%s2 + $0x68] sm:$0xff]
        %v330 = vld [vmem:[%s2 + $0x70] sm:$0xff]
        %v331 = vld [vmem:[%s2 + $0x78] sm:$0xff]
        %333 = vset.pattern.permute.xlu0 0
        %334 = vperm.xlu0 %333, %v316
        %v335 = vpop.permute.xlu0 %334
        %338 = vset.pattern.permute.xlu0 0
        %339 = vperm.xlu0 %338, %v317
        %v340 = vpop.permute.xlu0 %339
        %343 = vset.pattern.permute.xlu0 0
        %344 = vperm.xlu0 %343, %v318
        %v345 = vpop.permute.xlu0 %344
        %348 = vset.pattern.permute.xlu0 0
        %349 = vperm.xlu0 %348, %v319
        %v350 = vpop.permute.xlu0 %349
        %353 = vset.pattern.permute.xlu0 0
        %354 = vperm.xlu0 %353, %v320
        %v355 = vpop.permute.xlu0 %354
        %358 = vset.pattern.permute.xlu0 0
        %359 = vperm.xlu0 %358, %v321
        %v360 = vpop.permute.xlu0 %359
        %363 = vset.pattern.permute.xlu0 0
        %364 = vperm.xlu0 %363, %v322
        %v365 = vpop.permute.xlu0 %364
        %368 = vset.pattern.permute.xlu0 0
        %369 = vperm.xlu0 %368, %v323
        %v370 = vpop.permute.xlu0 %369
        %373 = vset.pattern.permute.xlu0 0
        %374 = vperm.xlu0 %373, %v324
        %v375 = vpop.permute.xlu0 %374
        %378 = vset.pattern.permute.xlu0 0
        %379 = vperm.xlu0 %378, %v325
        %v380 = vpop.permute.xlu0 %379
        %383 = vset.pattern.permute.xlu0 0
        %384 = vperm.xlu0 %383, %v326
        %v385 = vpop.permute.xlu0 %384
        %388 = vset.pattern.permute.xlu0 0
        %389 = vperm.xlu0 %388, %v327
        %v390 = vpop.permute.xlu0 %389
        %393 = vset.pattern.permute.xlu0 0
        %394 = vperm.xlu0 %393, %v328
        %v395 = vpop.permute.xlu0 %394
        %398 = vset.pattern.permute.xlu0 0
        %399 = vperm.xlu0 %398, %v329
        %v400 = vpop.permute.xlu0 %399
        %403 = vset.pattern.permute.xlu0 0
        %404 = vperm.xlu0 %403, %v330
        %v405 = vpop.permute.xlu0 %404
        %408 = vset.pattern.permute.xlu0 0
        %409 = vperm.xlu0 %408, %v331
        %v410 = vpop.permute.xlu0 %409
        %v428 = vunpack.c.l.b16 %v268
        %v429 = vunpack.c.l.b16 %v269
        %v430 = vunpack.c.l.b16 %v270
        %v431 = vunpack.c.l.b16 %v271
        %v432 = vunpack.c.l.b16 %v272
        %v433 = vunpack.c.l.b16 %v273
        %v434 = vunpack.c.l.b16 %v274
        %v435 = vunpack.c.l.b16 %v275
        %v436 = vunpack.c.l.b16 %v276
        %v437 = vunpack.c.l.b16 %v277
        %v438 = vunpack.c.l.b16 %v278
        %v439 = vunpack.c.l.b16 %v279
        %v440 = vunpack.c.l.b16 %v280
        %v441 = vunpack.c.l.b16 %v281
        %v442 = vunpack.c.l.b16 %v282
        %v443 = vunpack.c.l.b16 %v283
        %v444 = vpack.c.b16 %v429, %v428
        %v445 = vpack.c.b16 %v431, %v430
        %v446 = vpack.c.b16 %v433, %v432
        %v447 = vpack.c.b16 %v435, %v434
        %v448 = vpack.c.b16 %v437, %v436
        %v449 = vpack.c.b16 %v439, %v438
        %v450 = vpack.c.b16 %v441, %v440
        %v451 = vpack.c.b16 %v443, %v442
        %v484 = vunpack.c.l.b16 %v284
        %v485 = vunpack.c.h.b16 %v284
        %v486 = vunpack.c.l.b16 %v285
        %v487 = vunpack.c.h.b16 %v285
        %v488 = vunpack.c.l.b16 %v286
        %v489 = vunpack.c.h.b16 %v286
        %v490 = vunpack.c.l.b16 %v287
        %v491 = vunpack.c.h.b16 %v287
        %v492 = vunpack.c.l.b16 %v288
        %v493 = vunpack.c.h.b16 %v288
        %v494 = vunpack.c.l.b16 %v289
        %v495 = vunpack.c.h.b16 %v289
        %v496 = vunpack.c.l.b16 %v290
        %v497 = vunpack.c.h.b16 %v290
        %v498 = vunpack.c.l.b16 %v291
        %v499 = vunpack.c.h.b16 %v291
        %v500 = vunpack.c.l.b16 %v292
        %v501 = vunpack.c.h.b16 %v292
        %v502 = vunpack.c.l.b16 %v293
        %v503 = vunpack.c.h.b16 %v293
        %v504 = vunpack.c.l.b16 %v294
        %v505 = vunpack.c.h.b16 %v294
        %v506 = vunpack.c.l.b16 %v295
        %v507 = vunpack.c.h.b16 %v295
        %v508 = vunpack.c.l.b16 %v296
        %v509 = vunpack.c.h.b16 %v296
        %v510 = vunpack.c.l.b16 %v297
        %v511 = vunpack.c.h.b16 %v297
        %v512 = vunpack.c.l.b16 %v298
        %v513 = vunpack.c.h.b16 %v298
        %v514 = vunpack.c.l.b16 %v299
        %v515 = vunpack.c.h.b16 %v299
        %v516 = vunpack.c.l.b16 %v300
        %v517 = vunpack.c.h.b16 %v300
        %v518 = vunpack.c.l.b16 %v301
        %v519 = vunpack.c.h.b16 %v301
        %v520 = vunpack.c.l.b16 %v302
        %v521 = vunpack.c.h.b16 %v302
        %v522 = vunpack.c.l.b16 %v303
        %v523 = vunpack.c.h.b16 %v303
        %v524 = vunpack.c.l.b16 %v304
        %v525 = vunpack.c.h.b16 %v304
        %v526 = vunpack.c.l.b16 %v305
        %v527 = vunpack.c.h.b16 %v305
        %v528 = vunpack.c.l.b16 %v306
        %v529 = vunpack.c.h.b16 %v306
        %v530 = vunpack.c.l.b16 %v307
        %v531 = vunpack.c.h.b16 %v307
        %v532 = vunpack.c.l.b16 %v308
        %v533 = vunpack.c.h.b16 %v308
        %v534 = vunpack.c.l.b16 %v309
        %v535 = vunpack.c.h.b16 %v309
        %v536 = vunpack.c.l.b16 %v310
        %v537 = vunpack.c.h.b16 %v310
        %v538 = vunpack.c.l.b16 %v311
        %v539 = vunpack.c.h.b16 %v311
        %v540 = vunpack.c.l.b16 %v312
        %v541 = vunpack.c.h.b16 %v312
        %v542 = vunpack.c.l.b16 %v313
        %v543 = vunpack.c.h.b16 %v313
        %v544 = vunpack.c.l.b16 %v314
        %v545 = vunpack.c.h.b16 %v314
        %v546 = vunpack.c.l.b16 %v315
        %v547 = vunpack.c.h.b16 %v315
        %v548 = vpack.c.b16 %v500, %v484
        %v549 = vpack.c.b16 %v501, %v485
        %v550 = vpack.c.b16 %v502, %v486
        %v551 = vpack.c.b16 %v503, %v487
        %v552 = vpack.c.b16 %v504, %v488
        %v553 = vpack.c.b16 %v505, %v489
        %v554 = vpack.c.b16 %v506, %v490
        %v555 = vpack.c.b16 %v507, %v491
        %v556 = vpack.c.b16 %v508, %v492
        %v557 = vpack.c.b16 %v509, %v493
        %v558 = vpack.c.b16 %v510, %v494
        %v559 = vpack.c.b16 %v511, %v495
        %v560 = vpack.c.b16 %v512, %v496
        %v561 = vpack.c.b16 %v513, %v497
        %v562 = vpack.c.b16 %v514, %v498
        %v563 = vpack.c.b16 %v515, %v499
        %v564 = vpack.c.b16 %v532, %v516
        %v565 = vpack.c.b16 %v533, %v517
        %v566 = vpack.c.b16 %v534, %v518
        %v567 = vpack.c.b16 %v535, %v519
        %v568 = vpack.c.b16 %v536, %v520
        %v569 = vpack.c.b16 %v537, %v521
        %v570 = vpack.c.b16 %v538, %v522
        %v571 = vpack.c.b16 %v539, %v523
        %v572 = vpack.c.b16 %v540, %v524
        %v573 = vpack.c.b16 %v541, %v525
        %v574 = vpack.c.b16 %v542, %v526
        %v575 = vpack.c.b16 %v543, %v527
        %v576 = vpack.c.b16 %v544, %v528
        %v577 = vpack.c.b16 %v545, %v529
        %v578 = vpack.c.b16 %v546, %v530
        %v579 = vpack.c.b16 %v547, %v531
        %vm612 = vcmask 261120
        %v614 = vsel %vm612, %v444, 0
        %v617 = vsel %vm612, %v445, 0
        %v620 = vsel %vm612, %v446, 0
        %v623 = vsel %vm612, %v447, 0
        %v626 = vsel %vm612, %v448, 0
        %v629 = vsel %vm612, %v449, 0
        %v632 = vsel %vm612, %v450, 0
        %v635 = vsel %vm612, %v451, 0
        %637 = vmatpush.bf16.msra.mxu0 0
        %638 = vmatpush.bf16.msra.mxu0 0
        %639 = vmatpush.bf16.msra.mxu0 0
        %640 = vmatpush.bf16.msra.mxu0 0
        %641 = vmatpush.bf16.msra.mxu0 0
        %642 = vmatpush.bf16.msra.mxu0 0
        %643 = vmatpush.bf16.msra.mxu0 %v564
        %644 = vmatpush.bf16.msra.mxu0 %v548
        %645 = vmatmul.bf16.gmra.mxu0 %v614
        %v646 = vpop.f32.mrf.mxu0
        %v647 = vadd.f32 %v335, %v646
        %v648 = vpop.f32.mrf.mxu0
        %v649 = vadd.f32 %v340, %v648
        %650 = vmatmul.bf16.gmra.mxu0 %v617
        %v651 = vpop.f32.mrf.mxu0
        %v652 = vadd.f32 %v345, %v651
        %v653 = vpop.f32.mrf.mxu0
        %v654 = vadd.f32 %v350, %v653
        %655 = vmatmul.bf16.gmra.mxu0 %v620
        %v656 = vpop.f32.mrf.mxu0
        %v657 = vadd.f32 %v355, %v656
        %v658 = vpop.f32.mrf.mxu0
        %v659 = vadd.f32 %v360, %v658
        %660 = vmatmul.bf16.gmra.mxu0 %v623
        %v661 = vpop.f32.mrf.mxu0
        %v662 = vadd.f32 %v365, %v661
        %v663 = vpop.f32.mrf.mxu0
        %v664 = vadd.f32 %v370, %v663
        %665 = vmatmul.bf16.gmra.mxu0 %v626
        %v666 = vpop.f32.mrf.mxu0
        %v667 = vadd.f32 %v375, %v666
        %v668 = vpop.f32.mrf.mxu0
        %v669 = vadd.f32 %v380, %v668
        %670 = vmatmul.bf16.gmra.mxu0 %v629
        %v671 = vpop.f32.mrf.mxu0
        %v672 = vadd.f32 %v385, %v671
        %v673 = vpop.f32.mrf.mxu0
        %v674 = vadd.f32 %v390, %v673
        %675 = vmatmul.bf16.gmra.mxu0 %v632
        %v676 = vpop.f32.mrf.mxu0
        %v677 = vadd.f32 %v395, %v676
        %v678 = vpop.f32.mrf.mxu0
        %v679 = vadd.f32 %v400, %v678
        %680 = vmatmul.bf16.gmra.mxu0 %v635
        %v681 = vpop.f32.mrf.mxu0
        %v682 = vadd.f32 %v405, %v681
        %v683 = vpop.f32.mrf.mxu0
        %v684 = vadd.f32 %v410, %v683
        %685 = vdwg.mxu0
        %686 = vmatpush.bf16.msra.mxu0 0
        %687 = vmatpush.bf16.msra.mxu0 0
        %688 = vmatpush.bf16.msra.mxu0 0
        %689 = vmatpush.bf16.msra.mxu0 0
        %690 = vmatpush.bf16.msra.mxu0 0
        %691 = vmatpush.bf16.msra.mxu0 0
        %692 = vmatpush.bf16.msra.mxu0 %v565
        %693 = vmatpush.bf16.msra.mxu0 %v549
        %694 = vmatmul.bf16.gmra.mxu0 %v614
        %v695 = vpop.f32.mrf.mxu0
        %v696 = vadd.f32 %v335, %v695
        %v697 = vpop.f32.mrf.mxu0
        %v698 = vadd.f32 %v340, %v697
        %699 = vmatmul.bf16.gmra.mxu0 %v617
        %v700 = vpop.f32.mrf.mxu0
        %v701 = vadd.f32 %v345, %v700
        %v702 = vpop.f32.mrf.mxu0
        %v703 = vadd.f32 %v350, %v702
        %704 = vmatmul.bf16.gmra.mxu0 %v620
        %v705 = vpop.f32.mrf.mxu0
        %v706 = vadd.f32 %v355, %v705
        %v707 = vpop.f32.mrf.mxu0
        %v708 = vadd.f32 %v360, %v707
        %709 = vmatmul.bf16.gmra.mxu0 %v623
        %v710 = vpop.f32.mrf.mxu0
        %v711 = vadd.f32 %v365, %v710
        %v712 = vpop.f32.mrf.mxu0
        %v713 = vadd.f32 %v370, %v712
        %714 = vmatmul.bf16.gmra.mxu0 %v626
        %v715 = vpop.f32.mrf.mxu0
        %v716 = vadd.f32 %v375, %v715
        %v717 = vpop.f32.mrf.mxu0
        %v718 = vadd.f32 %v380, %v717
        %719 = vmatmul.bf16.gmra.mxu0 %v629
        %v720 = vpop.f32.mrf.mxu0
        %v721 = vadd.f32 %v385, %v720
        %v722 = vpop.f32.mrf.mxu0
        %v723 = vadd.f32 %v390, %v722
        %724 = vmatmul.bf16.gmra.mxu0 %v632
        %v725 = vpop.f32.mrf.mxu0
        %v726 = vadd.f32 %v395, %v725
        %v727 = vpop.f32.mrf.mxu0
        %v728 = vadd.f32 %v400, %v727
        %729 = vmatmul.bf16.gmra.mxu0 %v635
        %v730 = vpop.f32.mrf.mxu0
        %v731 = vadd.f32 %v405, %v730
        %v732 = vpop.f32.mrf.mxu0
        %v733 = vadd.f32 %v410, %v732
        %734 = vdwg.mxu0
        %735 = vmatpush.bf16.msra.mxu0 0
        %736 = vmatpush.bf16.msra.mxu0 0
        %737 = vmatpush.bf16.msra.mxu0 0
        %738 = vmatpush.bf16.msra.mxu0 0
        %739 = vmatpush.bf16.msra.mxu0 0
        %740 = vmatpush.bf16.msra.mxu0 0
        %741 = vmatpush.bf16.msra.mxu0 %v566
        %742 = vmatpush.bf16.msra.mxu0 %v550
        %743 = vmatmul.bf16.gmra.mxu0 %v614
        %v744 = vpop.f32.mrf.mxu0
        %v745 = vadd.f32 %v335, %v744
        %v746 = vpop.f32.mrf.mxu0
        %v747 = vadd.f32 %v340, %v746
        %748 = vmatmul.bf16.gmra.mxu0 %v617
        %v749 = vpop.f32.mrf.mxu0
        %v750 = vadd.f32 %v345, %v749
        %v751 = vpop.f32.mrf.mxu0
        %v752 = vadd.f32 %v350, %v751
        %753 = vmatmul.bf16.gmra.mxu0 %v620
        %v754 = vpop.f32.mrf.mxu0
        %v755 = vadd.f32 %v355, %v754
        %v756 = vpop.f32.mrf.mxu0
        %v757 = vadd.f32 %v360, %v756
        %758 = vmatmul.bf16.gmra.mxu0 %v623
        %v759 = vpop.f32.mrf.mxu0
        %v760 = vadd.f32 %v365, %v759
        %v761 = vpop.f32.mrf.mxu0
        %v762 = vadd.f32 %v370, %v761
        %763 = vmatmul.bf16.gmra.mxu0 %v626
        %v764 = vpop.f32.mrf.mxu0
        %v765 = vadd.f32 %v375, %v764
        %v766 = vpop.f32.mrf.mxu0
        %v767 = vadd.f32 %v380, %v766
        %768 = vmatmul.bf16.gmra.mxu0 %v629
        %v769 = vpop.f32.mrf.mxu0
        %v770 = vadd.f32 %v385, %v769
        %v771 = vpop.f32.mrf.mxu0
        %v772 = vadd.f32 %v390, %v771
        %773 = vmatmul.bf16.gmra.mxu0 %v632
        %v774 = vpop.f32.mrf.mxu0
        %v775 = vadd.f32 %v395, %v774
        %v776 = vpop.f32.mrf.mxu0
        %v777 = vadd.f32 %v400, %v776
        %778 = vmatmul.bf16.gmra.mxu0 %v635
        %v779 = vpop.f32.mrf.mxu0
        %v780 = vadd.f32 %v405, %v779
        %v781 = vpop.f32.mrf.mxu0
        %v782 = vadd.f32 %v410, %v781
        %783 = vdwg.mxu0
        %784 = vmatpush.bf16.msra.mxu0 0
        %785 = vmatpush.bf16.msra.mxu0 0
        %786 = vmatpush.bf16.msra.mxu0 0
        %787 = vmatpush.bf16.msra.mxu0 0
        %788 = vmatpush.bf16.msra.mxu0 0
        %789 = vmatpush.bf16.msra.mxu0 0
        %790 = vmatpush.bf16.msra.mxu0 %v567
        %791 = vmatpush.bf16.msra.mxu0 %v551
        %792 = vmatmul.bf16.gmra.mxu0 %v614
        %v793 = vpop.f32.mrf.mxu0
        %v794 = vadd.f32 %v335, %v793
        %v795 = vpop.f32.mrf.mxu0
        %v796 = vadd.f32 %v340, %v795
        %797 = vmatmul.bf16.gmra.mxu0 %v617
        %v798 = vpop.f32.mrf.mxu0
        %v799 = vadd.f32 %v345, %v798
        %v800 = vpop.f32.mrf.mxu0
        %v801 = vadd.f32 %v350, %v800
        %802 = vmatmul.bf16.gmra.mxu0 %v620
        %v803 = vpop.f32.mrf.mxu0
        %v804 = vadd.f32 %v355, %v803
        %v805 = vpop.f32.mrf.mxu0
        %v806 = vadd.f32 %v360, %v805
        %807 = vmatmul.bf16.gmra.mxu0 %v623
        %v808 = vpop.f32.mrf.mxu0
        %v809 = vadd.f32 %v365, %v808
        %v810 = vpop.f32.mrf.mxu0
        %v811 = vadd.f32 %v370, %v810
        %812 = vmatmul.bf16.gmra.mxu0 %v626
        %v813 = vpop.f32.mrf.mxu0
        %v814 = vadd.f32 %v375, %v813
        %v815 = vpop.f32.mrf.mxu0
        %v816 = vadd.f32 %v380, %v815
        %817 = vmatmul.bf16.gmra.mxu0 %v629
        %v818 = vpop.f32.mrf.mxu0
        %v819 = vadd.f32 %v385, %v818
        %v820 = vpop.f32.mrf.mxu0
        %v821 = vadd.f32 %v390, %v820
        %822 = vmatmul.bf16.gmra.mxu0 %v632
        %v823 = vpop.f32.mrf.mxu0
        %v824 = vadd.f32 %v395, %v823
        %v825 = vpop.f32.mrf.mxu0
        %v826 = vadd.f32 %v400, %v825
        %827 = vmatmul.bf16.gmra.mxu0 %v635
        %v828 = vpop.f32.mrf.mxu0
        %v829 = vadd.f32 %v405, %v828
        %v830 = vpop.f32.mrf.mxu0
        %v831 = vadd.f32 %v410, %v830
        %832 = vdwg.mxu0
        %833 = vmatpush.bf16.msra.mxu0 0
        %834 = vmatpush.bf16.msra.mxu0 0
        %835 = vmatpush.bf16.msra.mxu0 0
        %836 = vmatpush.bf16.msra.mxu0 0
        %837 = vmatpush.bf16.msra.mxu0 0
        %838 = vmatpush.bf16.msra.mxu0 0
        %839 = vmatpush.bf16.msra.mxu0 %v568
        %840 = vmatpush.bf16.msra.mxu0 %v552
        %841 = vmatmul.bf16.gmra.mxu0 %v614
        %v842 = vpop.f32.mrf.mxu0
        %v843 = vadd.f32 %v335, %v842
        %v844 = vpop.f32.mrf.mxu0
        %v845 = vadd.f32 %v340, %v844
        %846 = vmatmul.bf16.gmra.mxu0 %v617
        %v847 = vpop.f32.mrf.mxu0
        %v848 = vadd.f32 %v345, %v847
        %v849 = vpop.f32.mrf.mxu0
        %v850 = vadd.f32 %v350, %v849
        %851 = vmatmul.bf16.gmra.mxu0 %v620
        %v852 = vpop.f32.mrf.mxu0
        %v853 = vadd.f32 %v355, %v852
        %v854 = vpop.f32.mrf.mxu0
        %v855 = vadd.f32 %v360, %v854
        %856 = vmatmul.bf16.gmra.mxu0 %v623
        %v857 = vpop.f32.mrf.mxu0
        %v858 = vadd.f32 %v365, %v857
        %v859 = vpop.f32.mrf.mxu0
        %v860 = vadd.f32 %v370, %v859
        %861 = vmatmul.bf16.gmra.mxu0 %v626
        %v862 = vpop.f32.mrf.mxu0
        %v863 = vadd.f32 %v375, %v862
        %v864 = vpop.f32.mrf.mxu0
        %v865 = vadd.f32 %v380, %v864
        %866 = vmatmul.bf16.gmra.mxu0 %v629
        %v867 = vpop.f32.mrf.mxu0
        %v868 = vadd.f32 %v385, %v867
        %v869 = vpop.f32.mrf.mxu0
        %v870 = vadd.f32 %v390, %v869
        %871 = vmatmul.bf16.gmra.mxu0 %v632
        %v872 = vpop.f32.mrf.mxu0
        %v873 = vadd.f32 %v395, %v872
        %v874 = vpop.f32.mrf.mxu0
        %v875 = vadd.f32 %v400, %v874
        %876 = vmatmul.bf16.gmra.mxu0 %v635
        %v877 = vpop.f32.mrf.mxu0
        %v878 = vadd.f32 %v405, %v877
        %v879 = vpop.f32.mrf.mxu0
        %v880 = vadd.f32 %v410, %v879
        %881 = vdwg.mxu0
        %882 = vmatpush.bf16.msra.mxu0 0
        %883 = vmatpush.bf16.msra.mxu0 0
        %884 = vmatpush.bf16.msra.mxu0 0
        %885 = vmatpush.bf16.msra.mxu0 0
        %886 = vmatpush.bf16.msra.mxu0 0
        %887 = vmatpush.bf16.msra.mxu0 0
        %888 = vmatpush.bf16.msra.mxu0 %v569
        %889 = vmatpush.bf16.msra.mxu0 %v553
        %890 = vmatmul.bf16.gmra.mxu0 %v614
        %v891 = vpop.f32.mrf.mxu0
        %v892 = vadd.f32 %v335, %v891
        %v893 = vpop.f32.mrf.mxu0
        %v894 = vadd.f32 %v340, %v893
        %895 = vmatmul.bf16.gmra.mxu0 %v617
        %v896 = vpop.f32.mrf.mxu0
        %v897 = vadd.f32 %v345, %v896
        %v898 = vpop.f32.mrf.mxu0
        %v899 = vadd.f32 %v350, %v898
        %900 = vmatmul.bf16.gmra.mxu0 %v620
        %v901 = vpop.f32.mrf.mxu0
        %v902 = vadd.f32 %v355, %v901
        %v903 = vpop.f32.mrf.mxu0
        %v904 = vadd.f32 %v360, %v903
        %905 = vmatmul.bf16.gmra.mxu0 %v623
        %v906 = vpop.f32.mrf.mxu0
        %v907 = vadd.f32 %v365, %v906
        %v908 = vpop.f32.mrf.mxu0
        %v909 = vadd.f32 %v370, %v908
        %910 = vmatmul.bf16.gmra.mxu0 %v626
        %v911 = vpop.f32.mrf.mxu0
        %v912 = vadd.f32 %v375, %v911
        %v913 = vpop.f32.mrf.mxu0
        %v914 = vadd.f32 %v380, %v913
        %915 = vmatmul.bf16.gmra.mxu0 %v629
        %v916 = vpop.f32.mrf.mxu0
        %v917 = vadd.f32 %v385, %v916
        %v918 = vpop.f32.mrf.mxu0
        %v919 = vadd.f32 %v390, %v918
        %920 = vmatmul.bf16.gmra.mxu0 %v632
        %v921 = vpop.f32.mrf.mxu0
        %v922 = vadd.f32 %v395, %v921
        %v923 = vpop.f32.mrf.mxu0
        %v924 = vadd.f32 %v400, %v923
        %925 = vmatmul.bf16.gmra.mxu0 %v635
        %v926 = vpop.f32.mrf.mxu0
        %v927 = vadd.f32 %v405, %v926
        %v928 = vpop.f32.mrf.mxu0
        %v929 = vadd.f32 %v410, %v928
        %930 = vdwg.mxu0
        %931 = vmatpush.bf16.msra.mxu0 0
        %932 = vmatpush.bf16.msra.mxu0 0
        %933 = vmatpush.bf16.msra.mxu0 0
        %934 = vmatpush.bf16.msra.mxu0 0
        %935 = vmatpush.bf16.msra.mxu0 0
        %936 = vmatpush.bf16.msra.mxu0 0
        %937 = vmatpush.bf16.msra.mxu0 %v570
        %938 = vmatpush.bf16.msra.mxu0 %v554
        %939 = vmatmul.bf16.gmra.mxu0 %v614
        %v940 = vpop.f32.mrf.mxu0
        %v941 = vadd.f32 %v335, %v940
        %v942 = vpop.f32.mrf.mxu0
        %v943 = vadd.f32 %v340, %v942
        %944 = vmatmul.bf16.gmra.mxu0 %v617
        %v945 = vpop.f32.mrf.mxu0
        %v946 = vadd.f32 %v345, %v945
        %v947 = vpop.f32.mrf.mxu0
        %v948 = vadd.f32 %v350, %v947
        %949 = vmatmul.bf16.gmra.mxu0 %v620
        %v950 = vpop.f32.mrf.mxu0
        %v951 = vadd.f32 %v355, %v950
        %v952 = vpop.f32.mrf.mxu0
        %v953 = vadd.f32 %v360, %v952
        %954 = vmatmul.bf16.gmra.mxu0 %v623
        %v955 = vpop.f32.mrf.mxu0
        %v956 = vadd.f32 %v365, %v955
        %v957 = vpop.f32.mrf.mxu0
        %v958 = vadd.f32 %v370, %v957
        %959 = vmatmul.bf16.gmra.mxu0 %v626
        %v960 = vpop.f32.mrf.mxu0
        %v961 = vadd.f32 %v375, %v960
        %v962 = vpop.f32.mrf.mxu0
        %v963 = vadd.f32 %v380, %v962
        %964 = vmatmul.bf16.gmra.mxu0 %v629
        %v965 = vpop.f32.mrf.mxu0
        %v966 = vadd.f32 %v385, %v965
        %v967 = vpop.f32.mrf.mxu0
        %v968 = vadd.f32 %v390, %v967
        %969 = vmatmul.bf16.gmra.mxu0 %v632
        %v970 = vpop.f32.mrf.mxu0
        %v971 = vadd.f32 %v395, %v970
        %v972 = vpop.f32.mrf.mxu0
        %v973 = vadd.f32 %v400, %v972
        %974 = vmatmul.bf16.gmra.mxu0 %v635
        %v975 = vpop.f32.mrf.mxu0
        %v976 = vadd.f32 %v405, %v975
        %v977 = vpop.f32.mrf.mxu0
        %v978 = vadd.f32 %v410, %v977
        %979 = vdwg.mxu0
        %980 = vmatpush.bf16.msra.mxu0 0
        %981 = vmatpush.bf16.msra.mxu0 0
        %982 = vmatpush.bf16.msra.mxu0 0
        %983 = vmatpush.bf16.msra.mxu0 0
        %984 = vmatpush.bf16.msra.mxu0 0
        %985 = vmatpush.bf16.msra.mxu0 0
        %986 = vmatpush.bf16.msra.mxu0 %v571
        %987 = vmatpush.bf16.msra.mxu0 %v555
        %988 = vmatmul.bf16.gmra.mxu0 %v614
        %v989 = vpop.f32.mrf.mxu0
        %v990 = vadd.f32 %v335, %v989
        %v991 = vpop.f32.mrf.mxu0
        %v992 = vadd.f32 %v340, %v991
        %993 = vmatmul.bf16.gmra.mxu0 %v617
        %v994 = vpop.f32.mrf.mxu0
        %v995 = vadd.f32 %v345, %v994
        %v996 = vpop.f32.mrf.mxu0
        %v997 = vadd.f32 %v350, %v996
        %998 = vmatmul.bf16.gmra.mxu0 %v620
        %v999 = vpop.f32.mrf.mxu0
        %v1000 = vadd.f32 %v355, %v999
        %v1001 = vpop.f32.mrf.mxu0
        %v1002 = vadd.f32 %v360, %v1001
        %1003 = vmatmul.bf16.gmra.mxu0 %v623
        %v1004 = vpop.f32.mrf.mxu0
        %v1005 = vadd.f32 %v365, %v1004
        %v1006 = vpop.f32.mrf.mxu0
        %v1007 = vadd.f32 %v370, %v1006
        %1008 = vmatmul.bf16.gmra.mxu0 %v626
        %v1009 = vpop.f32.mrf.mxu0
        %v1010 = vadd.f32 %v375, %v1009
        %v1011 = vpop.f32.mrf.mxu0
        %v1012 = vadd.f32 %v380, %v1011
        %1013 = vmatmul.bf16.gmra.mxu0 %v629
        %v1014 = vpop.f32.mrf.mxu0
        %v1015 = vadd.f32 %v385, %v1014
        %v1016 = vpop.f32.mrf.mxu0
        %v1017 = vadd.f32 %v390, %v1016
        %1018 = vmatmul.bf16.gmra.mxu0 %v632
        %v1019 = vpop.f32.mrf.mxu0
        %v1020 = vadd.f32 %v395, %v1019
        %v1021 = vpop.f32.mrf.mxu0
        %v1022 = vadd.f32 %v400, %v1021
        %1023 = vmatmul.bf16.gmra.mxu0 %v635
        %v1024 = vpop.f32.mrf.mxu0
        %v1025 = vadd.f32 %v405, %v1024
        %v1026 = vpop.f32.mrf.mxu0
        %v1027 = vadd.f32 %v410, %v1026
        %1028 = vdwg.mxu0
        %1029 = vmatpush.bf16.msra.mxu0 0
        %1030 = vmatpush.bf16.msra.mxu0 0
        %1031 = vmatpush.bf16.msra.mxu0 0
        %1032 = vmatpush.bf16.msra.mxu0 0
        %1033 = vmatpush.bf16.msra.mxu0 0
        %1034 = vmatpush.bf16.msra.mxu0 0
        %1035 = vmatpush.bf16.msra.mxu0 %v572
        %1036 = vmatpush.bf16.msra.mxu0 %v556
        %1037 = vmatmul.bf16.gmra.mxu0 %v614
        %v1038 = vpop.f32.mrf.mxu0
        %v1039 = vadd.f32 %v335, %v1038
        %v1040 = vpop.f32.mrf.mxu0
        %v1041 = vadd.f32 %v340, %v1040
        %1042 = vmatmul.bf16.gmra.mxu0 %v617
        %v1043 = vpop.f32.mrf.mxu0
        %v1044 = vadd.f32 %v345, %v1043
        %v1045 = vpop.f32.mrf.mxu0
        %v1046 = vadd.f32 %v350, %v1045
        %1047 = vmatmul.bf16.gmra.mxu0 %v620
        %v1048 = vpop.f32.mrf.mxu0
        %v1049 = vadd.f32 %v355, %v1048
        %v1050 = vpop.f32.mrf.mxu0
        %v1051 = vadd.f32 %v360, %v1050
        %1052 = vmatmul.bf16.gmra.mxu0 %v623
        %v1053 = vpop.f32.mrf.mxu0
        %v1054 = vadd.f32 %v365, %v1053
        %v1055 = vpop.f32.mrf.mxu0
        %v1056 = vadd.f32 %v370, %v1055
        %1057 = vmatmul.bf16.gmra.mxu0 %v626
        %v1058 = vpop.f32.mrf.mxu0
        %v1059 = vadd.f32 %v375, %v1058
        %v1060 = vpop.f32.mrf.mxu0
        %v1061 = vadd.f32 %v380, %v1060
        %1062 = vmatmul.bf16.gmra.mxu0 %v629
        %v1063 = vpop.f32.mrf.mxu0
        %v1064 = vadd.f32 %v385, %v1063
        %v1065 = vpop.f32.mrf.mxu0
        %v1066 = vadd.f32 %v390, %v1065
        %1067 = vmatmul.bf16.gmra.mxu0 %v632
        %v1068 = vpop.f32.mrf.mxu0
        %v1069 = vadd.f32 %v395, %v1068
        %v1070 = vpop.f32.mrf.mxu0
        %v1071 = vadd.f32 %v400, %v1070
        %1072 = vmatmul.bf16.gmra.mxu0 %v635
        %v1073 = vpop.f32.mrf.mxu0
        %v1074 = vadd.f32 %v405, %v1073
        %v1075 = vpop.f32.mrf.mxu0
        %v1076 = vadd.f32 %v410, %v1075
        %1077 = vdwg.mxu0
        %1078 = vmatpush.bf16.msra.mxu0 0
        %1079 = vmatpush.bf16.msra.mxu0 0
        %1080 = vmatpush.bf16.msra.mxu0 0
        %1081 = vmatpush.bf16.msra.mxu0 0
        %1082 = vmatpush.bf16.msra.mxu0 0
        %1083 = vmatpush.bf16.msra.mxu0 0
        %1084 = vmatpush.bf16.msra.mxu0 %v573
        %1085 = vmatpush.bf16.msra.mxu0 %v557
        %1086 = vmatmul.bf16.gmra.mxu0 %v614
        %v1087 = vpop.f32.mrf.mxu0
        %v1088 = vadd.f32 %v335, %v1087
        %v1089 = vpop.f32.mrf.mxu0
        %v1090 = vadd.f32 %v340, %v1089
        %1091 = vmatmul.bf16.gmra.mxu0 %v617
        %v1092 = vpop.f32.mrf.mxu0
        %v1093 = vadd.f32 %v345, %v1092
        %v1094 = vpop.f32.mrf.mxu0
        %v1095 = vadd.f32 %v350, %v1094
        %1096 = vmatmul.bf16.gmra.mxu0 %v620
        %v1097 = vpop.f32.mrf.mxu0
        %v1098 = vadd.f32 %v355, %v1097
        %v1099 = vpop.f32.mrf.mxu0
        %v1100 = vadd.f32 %v360, %v1099
        %1101 = vmatmul.bf16.gmra.mxu0 %v623
        %v1102 = vpop.f32.mrf.mxu0
        %v1103 = vadd.f32 %v365, %v1102
        %v1104 = vpop.f32.mrf.mxu0
        %v1105 = vadd.f32 %v370, %v1104
        %1106 = vmatmul.bf16.gmra.mxu0 %v626
        %v1107 = vpop.f32.mrf.mxu0
        %v1108 = vadd.f32 %v375, %v1107
        %v1109 = vpop.f32.mrf.mxu0
        %v1110 = vadd.f32 %v380, %v1109
        %1111 = vmatmul.bf16.gmra.mxu0 %v629
        %v1112 = vpop.f32.mrf.mxu0
        %v1113 = vadd.f32 %v385, %v1112
        %v1114 = vpop.f32.mrf.mxu0
        %v1115 = vadd.f32 %v390, %v1114
        %1116 = vmatmul.bf16.gmra.mxu0 %v632
        %v1117 = vpop.f32.mrf.mxu0
        %v1118 = vadd.f32 %v395, %v1117
        %v1119 = vpop.f32.mrf.mxu0
        %v1120 = vadd.f32 %v400, %v1119
        %1121 = vmatmul.bf16.gmra.mxu0 %v635
        %v1122 = vpop.f32.mrf.mxu0
        %v1123 = vadd.f32 %v405, %v1122
        %v1124 = vpop.f32.mrf.mxu0
        %v1125 = vadd.f32 %v410, %v1124
        %1126 = vdwg.mxu0
        %1127 = vmatpush.bf16.msra.mxu0 0
        %1128 = vmatpush.bf16.msra.mxu0 0
        %1129 = vmatpush.bf16.msra.mxu0 0
        %1130 = vmatpush.bf16.msra.mxu0 0
        %1131 = vmatpush.bf16.msra.mxu0 0
        %1132 = vmatpush.bf16.msra.mxu0 0
        %1133 = vmatpush.bf16.msra.mxu0 %v574
        %1134 = vmatpush.bf16.msra.mxu0 %v558
        %1135 = vmatmul.bf16.gmra.mxu0 %v614
        %v1136 = vpop.f32.mrf.mxu0
        %v1137 = vadd.f32 %v335, %v1136
        %v1138 = vpop.f32.mrf.mxu0
        %v1139 = vadd.f32 %v340, %v1138
        %1140 = vmatmul.bf16.gmra.mxu0 %v617
        %v1141 = vpop.f32.mrf.mxu0
        %v1142 = vadd.f32 %v345, %v1141
        %v1143 = vpop.f32.mrf.mxu0
        %v1144 = vadd.f32 %v350, %v1143
        %1145 = vmatmul.bf16.gmra.mxu0 %v620
        %v1146 = vpop.f32.mrf.mxu0
        %v1147 = vadd.f32 %v355, %v1146
        %v1148 = vpop.f32.mrf.mxu0
        %v1149 = vadd.f32 %v360, %v1148
        %1150 = vmatmul.bf16.gmra.mxu0 %v623
        %v1151 = vpop.f32.mrf.mxu0
        %v1152 = vadd.f32 %v365, %v1151
        %v1153 = vpop.f32.mrf.mxu0
        %v1154 = vadd.f32 %v370, %v1153
        %1155 = vmatmul.bf16.gmra.mxu0 %v626
        %v1156 = vpop.f32.mrf.mxu0
        %v1157 = vadd.f32 %v375, %v1156
        %v1158 = vpop.f32.mrf.mxu0
        %v1159 = vadd.f32 %v380, %v1158
        %1160 = vmatmul.bf16.gmra.mxu0 %v629
        %v1161 = vpop.f32.mrf.mxu0
        %v1162 = vadd.f32 %v385, %v1161
        %v1163 = vpop.f32.mrf.mxu0
        %v1164 = vadd.f32 %v390, %v1163
        %1165 = vmatmul.bf16.gmra.mxu0 %v632
        %v1166 = vpop.f32.mrf.mxu0
        %v1167 = vadd.f32 %v395, %v1166
        %v1168 = vpop.f32.mrf.mxu0
        %v1169 = vadd.f32 %v400, %v1168
        %1170 = vmatmul.bf16.gmra.mxu0 %v635
        %v1171 = vpop.f32.mrf.mxu0
        %v1172 = vadd.f32 %v405, %v1171
        %v1173 = vpop.f32.mrf.mxu0
        %v1174 = vadd.f32 %v410, %v1173
        %1175 = vdwg.mxu0
        %1176 = vmatpush.bf16.msra.mxu0 0
        %1177 = vmatpush.bf16.msra.mxu0 0
        %1178 = vmatpush.bf16.msra.mxu0 0
        %1179 = vmatpush.bf16.msra.mxu0 0
        %1180 = vmatpush.bf16.msra.mxu0 0
        %1181 = vmatpush.bf16.msra.mxu0 0
        %1182 = vmatpush.bf16.msra.mxu0 %v575
        %1183 = vmatpush.bf16.msra.mxu0 %v559
        %1184 = vmatmul.bf16.gmra.mxu0 %v614
        %v1185 = vpop.f32.mrf.mxu0
        %v1186 = vadd.f32 %v335, %v1185
        %v1187 = vpop.f32.mrf.mxu0
        %v1188 = vadd.f32 %v340, %v1187
        %1189 = vmatmul.bf16.gmra.mxu0 %v617
        %v1190 = vpop.f32.mrf.mxu0
        %v1191 = vadd.f32 %v345, %v1190
        %v1192 = vpop.f32.mrf.mxu0
        %v1193 = vadd.f32 %v350, %v1192
        %1194 = vmatmul.bf16.gmra.mxu0 %v620
        %v1195 = vpop.f32.mrf.mxu0
        %v1196 = vadd.f32 %v355, %v1195
        %v1197 = vpop.f32.mrf.mxu0
        %v1198 = vadd.f32 %v360, %v1197
        %1199 = vmatmul.bf16.gmra.mxu0 %v623
        %v1200 = vpop.f32.mrf.mxu0
        %v1201 = vadd.f32 %v365, %v1200
        %v1202 = vpop.f32.mrf.mxu0
        %v1203 = vadd.f32 %v370, %v1202
        %1204 = vmatmul.bf16.gmra.mxu0 %v626
        %v1205 = vpop.f32.mrf.mxu0
        %v1206 = vadd.f32 %v375, %v1205
        %v1207 = vpop.f32.mrf.mxu0
        %v1208 = vadd.f32 %v380, %v1207
        %1209 = vmatmul.bf16.gmra.mxu0 %v629
        %v1210 = vpop.f32.mrf.mxu0
        %v1211 = vadd.f32 %v385, %v1210
        %v1212 = vpop.f32.mrf.mxu0
        %v1213 = vadd.f32 %v390, %v1212
        %1214 = vmatmul.bf16.gmra.mxu0 %v632
        %v1215 = vpop.f32.mrf.mxu0
        %v1216 = vadd.f32 %v395, %v1215
        %v1217 = vpop.f32.mrf.mxu0
        %v1218 = vadd.f32 %v400, %v1217
        %1219 = vmatmul.bf16.gmra.mxu0 %v635
        %v1220 = vpop.f32.mrf.mxu0
        %v1221 = vadd.f32 %v405, %v1220
        %v1222 = vpop.f32.mrf.mxu0
        %v1223 = vadd.f32 %v410, %v1222
        %1224 = vdwg.mxu0
        %1225 = vmatpush.bf16.msra.mxu0 0
        %1226 = vmatpush.bf16.msra.mxu0 0
        %1227 = vmatpush.bf16.msra.mxu0 0
        %1228 = vmatpush.bf16.msra.mxu0 0
        %1229 = vmatpush.bf16.msra.mxu0 0
        %1230 = vmatpush.bf16.msra.mxu0 0
        %1231 = vmatpush.bf16.msra.mxu0 %v576
        %1232 = vmatpush.bf16.msra.mxu0 %v560
        %1233 = vmatmul.bf16.gmra.mxu0 %v614
        %v1234 = vpop.f32.mrf.mxu0
        %v1235 = vadd.f32 %v335, %v1234
        %v1236 = vpop.f32.mrf.mxu0
        %v1237 = vadd.f32 %v340, %v1236
        %1238 = vmatmul.bf16.gmra.mxu0 %v617
        %v1239 = vpop.f32.mrf.mxu0
        %v1240 = vadd.f32 %v345, %v1239
        %v1241 = vpop.f32.mrf.mxu0
        %v1242 = vadd.f32 %v350, %v1241
        %1243 = vmatmul.bf16.gmra.mxu0 %v620
        %v1244 = vpop.f32.mrf.mxu0
        %v1245 = vadd.f32 %v355, %v1244
        %v1246 = vpop.f32.mrf.mxu0
        %v1247 = vadd.f32 %v360, %v1246
        %1248 = vmatmul.bf16.gmra.mxu0 %v623
        %v1249 = vpop.f32.mrf.mxu0
        %v1250 = vadd.f32 %v365, %v1249
        %v1251 = vpop.f32.mrf.mxu0
        %v1252 = vadd.f32 %v370, %v1251
        %1253 = vmatmul.bf16.gmra.mxu0 %v626
        %v1254 = vpop.f32.mrf.mxu0
        %v1255 = vadd.f32 %v375, %v1254
        %v1256 = vpop.f32.mrf.mxu0
        %v1257 = vadd.f32 %v380, %v1256
        %1258 = vmatmul.bf16.gmra.mxu0 %v629
        %v1259 = vpop.f32.mrf.mxu0
        %v1260 = vadd.f32 %v385, %v1259
        %v1261 = vpop.f32.mrf.mxu0
        %v1262 = vadd.f32 %v390, %v1261
        %1263 = vmatmul.bf16.gmra.mxu0 %v632
        %v1264 = vpop.f32.mrf.mxu0
        %v1265 = vadd.f32 %v395, %v1264
        %v1266 = vpop.f32.mrf.mxu0
        %v1267 = vadd.f32 %v400, %v1266
        %1268 = vmatmul.bf16.gmra.mxu0 %v635
        %v1269 = vpop.f32.mrf.mxu0
        %v1270 = vadd.f32 %v405, %v1269
        %v1271 = vpop.f32.mrf.mxu0
        %v1272 = vadd.f32 %v410, %v1271
        %1273 = vdwg.mxu0
        %1274 = vmatpush.bf16.msra.mxu0 0
        %1275 = vmatpush.bf16.msra.mxu0 0
        %1276 = vmatpush.bf16.msra.mxu0 0
        %1277 = vmatpush.bf16.msra.mxu0 0
        %1278 = vmatpush.bf16.msra.mxu0 0
        %1279 = vmatpush.bf16.msra.mxu0 0
        %1280 = vmatpush.bf16.msra.mxu0 %v577
        %1281 = vmatpush.bf16.msra.mxu0 %v561
        %1282 = vmatmul.bf16.gmra.mxu0 %v614
        %v1283 = vpop.f32.mrf.mxu0
        %v1284 = vadd.f32 %v335, %v1283
        %v1285 = vpop.f32.mrf.mxu0
        %v1286 = vadd.f32 %v340, %v1285
        %1287 = vmatmul.bf16.gmra.mxu0 %v617
        %v1288 = vpop.f32.mrf.mxu0
        %v1289 = vadd.f32 %v345, %v1288
        %v1290 = vpop.f32.mrf.mxu0
        %v1291 = vadd.f32 %v350, %v1290
        %1292 = vmatmul.bf16.gmra.mxu0 %v620
        %v1293 = vpop.f32.mrf.mxu0
        %v1294 = vadd.f32 %v355, %v1293
        %v1295 = vpop.f32.mrf.mxu0
        %v1296 = vadd.f32 %v360, %v1295
        %1297 = vmatmul.bf16.gmra.mxu0 %v623
        %v1298 = vpop.f32.mrf.mxu0
        %v1299 = vadd.f32 %v365, %v1298
        %v1300 = vpop.f32.mrf.mxu0
        %v1301 = vadd.f32 %v370, %v1300
        %1302 = vmatmul.bf16.gmra.mxu0 %v626
        %v1303 = vpop.f32.mrf.mxu0
        %v1304 = vadd.f32 %v375, %v1303
        %v1305 = vpop.f32.mrf.mxu0
        %v1306 = vadd.f32 %v380, %v1305
        %1307 = vmatmul.bf16.gmra.mxu0 %v629
        %v1308 = vpop.f32.mrf.mxu0
        %v1309 = vadd.f32 %v385, %v1308
        %v1310 = vpop.f32.mrf.mxu0
        %v1311 = vadd.f32 %v390, %v1310
        %1312 = vmatmul.bf16.gmra.mxu0 %v632
        %v1313 = vpop.f32.mrf.mxu0
        %v1314 = vadd.f32 %v395, %v1313
        %v1315 = vpop.f32.mrf.mxu0
        %v1316 = vadd.f32 %v400, %v1315
        %1317 = vmatmul.bf16.gmra.mxu0 %v635
        %v1318 = vpop.f32.mrf.mxu0
        %v1319 = vadd.f32 %v405, %v1318
        %v1320 = vpop.f32.mrf.mxu0
        %v1321 = vadd.f32 %v410, %v1320
        %1322 = vdwg.mxu0
        %1323 = vmatpush.bf16.msra.mxu0 0
        %1324 = vmatpush.bf16.msra.mxu0 0
        %1325 = vmatpush.bf16.msra.mxu0 0
        %1326 = vmatpush.bf16.msra.mxu0 0
        %1327 = vmatpush.bf16.msra.mxu0 0
        %1328 = vmatpush.bf16.msra.mxu0 0
        %1329 = vmatpush.bf16.msra.mxu0 %v578
        %1330 = vmatpush.bf16.msra.mxu0 %v562
        %1331 = vmatmul.bf16.gmra.mxu0 %v614
        %v1332 = vpop.f32.mrf.mxu0
        %v1333 = vadd.f32 %v335, %v1332
        %v1334 = vpop.f32.mrf.mxu0
        %v1335 = vadd.f32 %v340, %v1334
        %1336 = vmatmul.bf16.gmra.mxu0 %v617
        %v1337 = vpop.f32.mrf.mxu0
        %v1338 = vadd.f32 %v345, %v1337
        %v1339 = vpop.f32.mrf.mxu0
        %v1340 = vadd.f32 %v350, %v1339
        %1341 = vmatmul.bf16.gmra.mxu0 %v620
        %v1342 = vpop.f32.mrf.mxu0
        %v1343 = vadd.f32 %v355, %v1342
        %v1344 = vpop.f32.mrf.mxu0
        %v1345 = vadd.f32 %v360, %v1344
        %1346 = vmatmul.bf16.gmra.mxu0 %v623
        %v1347 = vpop.f32.mrf.mxu0
        %v1348 = vadd.f32 %v365, %v1347
        %v1349 = vpop.f32.mrf.mxu0
        %v1350 = vadd.f32 %v370, %v1349
        %1351 = vmatmul.bf16.gmra.mxu0 %v626
        %v1352 = vpop.f32.mrf.mxu0
        %v1353 = vadd.f32 %v375, %v1352
        %v1354 = vpop.f32.mrf.mxu0
        %v1355 = vadd.f32 %v380, %v1354
        %1356 = vmatmul.bf16.gmra.mxu0 %v629
        %v1357 = vpop.f32.mrf.mxu0
        %v1358 = vadd.f32 %v385, %v1357
        %v1359 = vpop.f32.mrf.mxu0
        %v1360 = vadd.f32 %v390, %v1359
        %1361 = vmatmul.bf16.gmra.mxu0 %v632
        %v1362 = vpop.f32.mrf.mxu0
        %v1363 = vadd.f32 %v395, %v1362
        %v1364 = vpop.f32.mrf.mxu0
        %v1365 = vadd.f32 %v400, %v1364
        %1366 = vmatmul.bf16.gmra.mxu0 %v635
        %v1367 = vpop.f32.mrf.mxu0
        %v1368 = vadd.f32 %v405, %v1367
        %v1369 = vpop.f32.mrf.mxu0
        %v1370 = vadd.f32 %v410, %v1369
        %1371 = vdwg.mxu0
        %1372 = vmatpush.bf16.msra.mxu0 0
        %1373 = vmatpush.bf16.msra.mxu0 0
        %1374 = vmatpush.bf16.msra.mxu0 0
        %1375 = vmatpush.bf16.msra.mxu0 0
        %1376 = vmatpush.bf16.msra.mxu0 0
        %1377 = vmatpush.bf16.msra.mxu0 0
        %1378 = vmatpush.bf16.msra.mxu0 %v579
        %1379 = vmatpush.bf16.msra.mxu0 %v563
        %1380 = vmatmul.bf16.gmra.mxu0 %v614
        %v1381 = vpop.f32.mrf.mxu0
        %v1382 = vadd.f32 %v335, %v1381
        %v1383 = vpop.f32.mrf.mxu0
        %v1384 = vadd.f32 %v340, %v1383
        %1385 = vmatmul.bf16.gmra.mxu0 %v617
        %v1386 = vpop.f32.mrf.mxu0
        %v1387 = vadd.f32 %v345, %v1386
        %v1388 = vpop.f32.mrf.mxu0
        %v1389 = vadd.f32 %v350, %v1388
        %1390 = vmatmul.bf16.gmra.mxu0 %v620
        %v1391 = vpop.f32.mrf.mxu0
        %v1392 = vadd.f32 %v355, %v1391
        %v1393 = vpop.f32.mrf.mxu0
        %v1394 = vadd.f32 %v360, %v1393
        %1395 = vmatmul.bf16.gmra.mxu0 %v623
        %v1396 = vpop.f32.mrf.mxu0
        %v1397 = vadd.f32 %v365, %v1396
        %v1398 = vpop.f32.mrf.mxu0
        %v1399 = vadd.f32 %v370, %v1398
        %1400 = vmatmul.bf16.gmra.mxu0 %v626
        %v1401 = vpop.f32.mrf.mxu0
        %v1402 = vadd.f32 %v375, %v1401
        %v1403 = vpop.f32.mrf.mxu0
        %v1404 = vadd.f32 %v380, %v1403
        %1405 = vmatmul.bf16.gmra.mxu0 %v629
        %v1406 = vpop.f32.mrf.mxu0
        %v1407 = vadd.f32 %v385, %v1406
        %v1408 = vpop.f32.mrf.mxu0
        %v1409 = vadd.f32 %v390, %v1408
        %1410 = vmatmul.bf16.gmra.mxu0 %v632
        %v1411 = vpop.f32.mrf.mxu0
        %v1412 = vadd.f32 %v395, %v1411
        %v1413 = vpop.f32.mrf.mxu0
        %v1414 = vadd.f32 %v400, %v1413
        %1415 = vmatmul.bf16.gmra.mxu0 %v635
        %v1416 = vpop.f32.mrf.mxu0
        %v1417 = vadd.f32 %v405, %v1416
        %v1418 = vpop.f32.mrf.mxu0
        %v1419 = vadd.f32 %v410, %v1418
        %1420 = vdwg.mxu0
        %v1421 = vmax.f32 %v647, 0.0
        %v1422 = vmax.f32 %v696, 0.0
        %v1423 = vmax.f32 %v745, 0.0
        %v1424 = vmax.f32 %v794, 0.0
        %v1425 = vmax.f32 %v843, 0.0
        %v1426 = vmax.f32 %v892, 0.0
        %v1427 = vmax.f32 %v941, 0.0
        %v1428 = vmax.f32 %v990, 0.0
        %v1429 = vmax.f32 %v1039, 0.0
        %v1430 = vmax.f32 %v1088, 0.0
        %v1431 = vmax.f32 %v1137, 0.0
        %v1432 = vmax.f32 %v1186, 0.0
        %v1433 = vmax.f32 %v1235, 0.0
        %v1434 = vmax.f32 %v1284, 0.0
        %v1435 = vmax.f32 %v1333, 0.0
        %v1436 = vmax.f32 %v1382, 0.0
        %v1437 = vmax.f32 %v649, 0.0
        %v1438 = vmax.f32 %v698, 0.0
        %v1439 = vmax.f32 %v747, 0.0
        %v1440 = vmax.f32 %v796, 0.0
        %v1441 = vmax.f32 %v845, 0.0
        %v1442 = vmax.f32 %v894, 0.0
        %v1443 = vmax.f32 %v943, 0.0
        %v1444 = vmax.f32 %v992, 0.0
        %v1445 = vmax.f32 %v1041, 0.0
        %v1446 = vmax.f32 %v1090, 0.0
        %v1447 = vmax.f32 %v1139, 0.0
        %v1448 = vmax.f32 %v1188, 0.0
        %v1449 = vmax.f32 %v1237, 0.0
        %v1450 = vmax.f32 %v1286, 0.0
        %v1451 = vmax.f32 %v1335, 0.0
        %v1452 = vmax.f32 %v1384, 0.0
        %v1453 = vmax.f32 %v652, 0.0
        %v1454 = vmax.f32 %v701, 0.0
        %v1455 = vmax.f32 %v750, 0.0
        %v1456 = vmax.f32 %v799, 0.0
        %v1457 = vmax.f32 %v848, 0.0
        %v1458 = vmax.f32 %v897, 0.0
        %v1459 = vmax.f32 %v946, 0.0
        %v1460 = vmax.f32 %v995, 0.0
        %v1461 = vmax.f32 %v1044, 0.0
        %v1462 = vmax.f32 %v1093, 0.0
        %v1463 = vmax.f32 %v1142, 0.0
        %v1464 = vmax.f32 %v1191, 0.0
        %v1465 = vmax.f32 %v1240, 0.0
        %v1466 = vmax.f32 %v1289, 0.0
        %v1467 = vmax.f32 %v1338, 0.0
        %v1468 = vmax.f32 %v1387, 0.0
        %v1469 = vmax.f32 %v654, 0.0
        %v1470 = vmax.f32 %v703, 0.0
        %v1471 = vmax.f32 %v752, 0.0
        %v1472 = vmax.f32 %v801, 0.0
        %v1473 = vmax.f32 %v850, 0.0
        %v1474 = vmax.f32 %v899, 0.0
        %v1475 = vmax.f32 %v948, 0.0
        %v1476 = vmax.f32 %v997, 0.0
        %v1477 = vmax.f32 %v1046, 0.0
        %v1478 = vmax.f32 %v1095, 0.0
        %v1479 = vmax.f32 %v1144, 0.0
        %v1480 = vmax.f32 %v1193, 0.0
        %v1481 = vmax.f32 %v1242, 0.0
        %v1482 = vmax.f32 %v1291, 0.0
        %v1483 = vmax.f32 %v1340, 0.0
        %v1484 = vmax.f32 %v1389, 0.0
        %v1485 = vmax.f32 %v657, 0.0
        %v1486 = vmax.f32 %v706, 0.0
        %v1487 = vmax.f32 %v755, 0.0
        %v1488 = vmax.f32 %v804, 0.0
        %v1489 = vmax.f32 %v853, 0.0
        %v1490 = vmax.f32 %v902, 0.0
        %v1491 = vmax.f32 %v951, 0.0
        %v1492 = vmax.f32 %v1000, 0.0
        %v1493 = vmax.f32 %v1049, 0.0
        %v1494 = vmax.f32 %v1098, 0.0
        %v1495 = vmax.f32 %v1147, 0.0
        %v1496 = vmax.f32 %v1196, 0.0
        %v1497 = vmax.f32 %v1245, 0.0
        %v1498 = vmax.f32 %v1294, 0.0
        %v1499 = vmax.f32 %v1343, 0.0
        %v1500 = vmax.f32 %v1392, 0.0
        %v1501 = vmax.f32 %v659, 0.0
        %v1502 = vmax.f32 %v708, 0.0
        %v1503 = vmax.f32 %v757, 0.0
        %v1504 = vmax.f32 %v806, 0.0
        %v1505 = vmax.f32 %v855, 0.0
        %v1506 = vmax.f32 %v904, 0.0
        %v1507 = vmax.f32 %v953, 0.0
        %v1508 = vmax.f32 %v1002, 0.0
        %v1509 = vmax.f32 %v1051, 0.0
        %v1510 = vmax.f32 %v1100, 0.0
        %v1511 = vmax.f32 %v1149, 0.0
        %v1512 = vmax.f32 %v1198, 0.0
        %v1513 = vmax.f32 %v1247, 0.0
        %v1514 = vmax.f32 %v1296, 0.0
        %v1515 = vmax.f32 %v1345, 0.0
        %v1516 = vmax.f32 %v1394, 0.0
        %v1517 = vmax.f32 %v662, 0.0
        %v1518 = vmax.f32 %v711, 0.0
        %v1519 = vmax.f32 %v760, 0.0
        %v1520 = vmax.f32 %v809, 0.0
        %v1521 = vmax.f32 %v858, 0.0
        %v1522 = vmax.f32 %v907, 0.0
        %v1523 = vmax.f32 %v956, 0.0
        %v1524 = vmax.f32 %v1005, 0.0
        %v1525 = vmax.f32 %v1054, 0.0
        %v1526 = vmax.f32 %v1103, 0.0
        %v1527 = vmax.f32 %v1152, 0.0
        %v1528 = vmax.f32 %v1201, 0.0
        %v1529 = vmax.f32 %v1250, 0.0
        %v1530 = vmax.f32 %v1299, 0.0
        %v1531 = vmax.f32 %v1348, 0.0
        %v1532 = vmax.f32 %v1397, 0.0
        %v1533 = vmax.f32 %v664, 0.0
        %v1534 = vmax.f32 %v713, 0.0
        %v1535 = vmax.f32 %v762, 0.0
        %v1536 = vmax.f32 %v811, 0.0
        %v1537 = vmax.f32 %v860, 0.0
        %v1538 = vmax.f32 %v909, 0.0
        %v1539 = vmax.f32 %v958, 0.0
        %v1540 = vmax.f32 %v1007, 0.0
        %v1541 = vmax.f32 %v1056, 0.0
        %v1542 = vmax.f32 %v1105, 0.0
        %v1543 = vmax.f32 %v1154, 0.0
        %v1544 = vmax.f32 %v1203, 0.0
        %v1545 = vmax.f32 %v1252, 0.0
        %v1546 = vmax.f32 %v1301, 0.0
        %v1547 = vmax.f32 %v1350, 0.0
        %v1548 = vmax.f32 %v1399, 0.0
        %v1549 = vmax.f32 %v667, 0.0
        %v1550 = vmax.f32 %v716, 0.0
        %v1551 = vmax.f32 %v765, 0.0
        %v1552 = vmax.f32 %v814, 0.0
        %v1553 = vmax.f32 %v863, 0.0
        %v1554 = vmax.f32 %v912, 0.0
        %v1555 = vmax.f32 %v961, 0.0
        %v1556 = vmax.f32 %v1010, 0.0
        %v1557 = vmax.f32 %v1059, 0.0
        %v1558 = vmax.f32 %v1108, 0.0
        %v1559 = vmax.f32 %v1157, 0.0
        %v1560 = vmax.f32 %v1206, 0.0
        %v1561 = vmax.f32 %v1255, 0.0
        %v1562 = vmax.f32 %v1304, 0.0
        %v1563 = vmax.f32 %v1353, 0.0
        %v1564 = vmax.f32 %v1402, 0.0
        %v1565 = vmax.f32 %v669, 0.0
        %v1566 = vmax.f32 %v718, 0.0
        %v1567 = vmax.f32 %v767, 0.0
        %v1568 = vmax.f32 %v816, 0.0
        %v1569 = vmax.f32 %v865, 0.0
        %v1570 = vmax.f32 %v914, 0.0
        %v1571 = vmax.f32 %v963, 0.0
        %v1572 = vmax.f32 %v1012, 0.0
        %v1573 = vmax.f32 %v1061, 0.0
        %v1574 = vmax.f32 %v1110, 0.0
        %v1575 = vmax.f32 %v1159, 0.0
        %v1576 = vmax.f32 %v1208, 0.0
        %v1577 = vmax.f32 %v1257, 0.0
        %v1578 = vmax.f32 %v1306, 0.0
        %v1579 = vmax.f32 %v1355, 0.0
        %v1580 = vmax.f32 %v1404, 0.0
        %v1581 = vmax.f32 %v672, 0.0
        %v1582 = vmax.f32 %v721, 0.0
        %v1583 = vmax.f32 %v770, 0.0
        %v1584 = vmax.f32 %v819, 0.0
        %v1585 = vmax.f32 %v868, 0.0
        %v1586 = vmax.f32 %v917, 0.0
        %v1587 = vmax.f32 %v966, 0.0
        %v1588 = vmax.f32 %v1015, 0.0
        %v1589 = vmax.f32 %v1064, 0.0
        %v1590 = vmax.f32 %v1113, 0.0
        %v1591 = vmax.f32 %v1162, 0.0
        %v1592 = vmax.f32 %v1211, 0.0
        %v1593 = vmax.f32 %v1260, 0.0
        %v1594 = vmax.f32 %v1309, 0.0
        %v1595 = vmax.f32 %v1358, 0.0
        %v1596 = vmax.f32 %v1407, 0.0
        %v1597 = vmax.f32 %v674, 0.0
        %v1598 = vmax.f32 %v723, 0.0
        %v1599 = vmax.f32 %v772, 0.0
        %v1600 = vmax.f32 %v821, 0.0
        %v1601 = vmax.f32 %v870, 0.0
        %v1602 = vmax.f32 %v919, 0.0
        %v1603 = vmax.f32 %v968, 0.0
        %v1604 = vmax.f32 %v1017, 0.0
        %v1605 = vmax.f32 %v1066, 0.0
        %v1606 = vmax.f32 %v1115, 0.0
        %v1607 = vmax.f32 %v1164, 0.0
        %v1608 = vmax.f32 %v1213, 0.0
        %v1609 = vmax.f32 %v1262, 0.0
        %v1610 = vmax.f32 %v1311, 0.0
        %v1611 = vmax.f32 %v1360, 0.0
        %v1612 = vmax.f32 %v1409, 0.0
        %v1613 = vmax.f32 %v677, 0.0
        %v1614 = vmax.f32 %v726, 0.0
        %v1615 = vmax.f32 %v775, 0.0
        %v1616 = vmax.f32 %v824, 0.0
        %v1617 = vmax.f32 %v873, 0.0
        %v1618 = vmax.f32 %v922, 0.0
        %v1619 = vmax.f32 %v971, 0.0
        %v1620 = vmax.f32 %v1020, 0.0
        %v1621 = vmax.f32 %v1069, 0.0
        %v1622 = vmax.f32 %v1118, 0.0
        %v1623 = vmax.f32 %v1167, 0.0
        %v1624 = vmax.f32 %v1216, 0.0
        %v1625 = vmax.f32 %v1265, 0.0
        %v1626 = vmax.f32 %v1314, 0.0
        %v1627 = vmax.f32 %v1363, 0.0
        %v1628 = vmax.f32 %v1412, 0.0
        %v1629 = vmax.f32 %v679, 0.0
        %v1630 = vmax.f32 %v728, 0.0
        %v1631 = vmax.f32 %v777, 0.0
        %v1632 = vmax.f32 %v826, 0.0
        %v1633 = vmax.f32 %v875, 0.0
        %v1634 = vmax.f32 %v924, 0.0
        %v1635 = vmax.f32 %v973, 0.0
        %v1636 = vmax.f32 %v1022, 0.0
        %v1637 = vmax.f32 %v1071, 0.0
        %v1638 = vmax.f32 %v1120, 0.0
        %v1639 = vmax.f32 %v1169, 0.0
        %v1640 = vmax.f32 %v1218, 0.0
        %v1641 = vmax.f32 %v1267, 0.0
        %v1642 = vmax.f32 %v1316, 0.0
        %v1643 = vmax.f32 %v1365, 0.0
        %v1644 = vmax.f32 %v1414, 0.0
        %v1645 = vmax.f32 %v682, 0.0
        %v1646 = vmax.f32 %v731, 0.0
        %v1647 = vmax.f32 %v780, 0.0
        %v1648 = vmax.f32 %v829, 0.0
        %v1649 = vmax.f32 %v878, 0.0
        %v1650 = vmax.f32 %v927, 0.0
        %v1651 = vmax.f32 %v976, 0.0
        %v1652 = vmax.f32 %v1025, 0.0
        %v1653 = vmax.f32 %v1074, 0.0
        %v1654 = vmax.f32 %v1123, 0.0
        %v1655 = vmax.f32 %v1172, 0.0
        %v1656 = vmax.f32 %v1221, 0.0
        %v1657 = vmax.f32 %v1270, 0.0
        %v1658 = vmax.f32 %v1319, 0.0
        %v1659 = vmax.f32 %v1368, 0.0
        %v1660 = vmax.f32 %v1417, 0.0
        %v1661 = vmax.f32 %v684, 0.0
        %v1662 = vmax.f32 %v733, 0.0
        %v1663 = vmax.f32 %v782, 0.0
        %v1664 = vmax.f32 %v831, 0.0
        %v1665 = vmax.f32 %v880, 0.0
        %v1666 = vmax.f32 %v929, 0.0
        %v1667 = vmax.f32 %v978, 0.0
        %v1668 = vmax.f32 %v1027, 0.0
        %v1669 = vmax.f32 %v1076, 0.0
        %v1670 = vmax.f32 %v1125, 0.0
        %v1671 = vmax.f32 %v1174, 0.0
        %v1672 = vmax.f32 %v1223, 0.0
        %v1673 = vmax.f32 %v1272, 0.0
        %v1674 = vmax.f32 %v1321, 0.0
        %v1675 = vmax.f32 %v1370, 0.0
        %v1676 = vmax.f32 %v1419, 0.0
        %1677 = vst [vmem:[%s264] sm:$0xff] %v1421
        %1678 = vst [vmem:[%s264 + $0x8] sm:$0xff] %v1422
        %1679 = vst [vmem:[%s264 + $0x10] sm:$0xff] %v1423
        %1680 = vst [vmem:[%s264 + $0x18] sm:$0xff] %v1424
        %1681 = vst [vmem:[%s264 + $0x20] sm:$0xff] %v1425
        %1682 = vst [vmem:[%s264 + $0x28] sm:$0xff] %v1426
        %1683 = vst [vmem:[%s264 + $0x30] sm:$0xff] %v1427
        %1684 = vst [vmem:[%s264 + $0x38] sm:$0xff] %v1428
        %1685 = vst [vmem:[%s264 + $0x40] sm:$0xff] %v1429
        %1686 = vst [vmem:[%s264 + $0x48] sm:$0xff] %v1430
        %1687 = vst [vmem:[%s264 + $0x50] sm:$0xff] %v1431
        %1688 = vst [vmem:[%s264 + $0x58] sm:$0xff] %v1432
        %1689 = vst [vmem:[%s264 + $0x60] sm:$0xff] %v1433
        %1690 = vst [vmem:[%s264 + $0x68] sm:$0xff] %v1434
        %1691 = vst [vmem:[%s264 + $0x70] sm:$0xff] %v1435
        %1692 = vst [vmem:[%s264 + $0x78] sm:$0xff] %v1436
        %1693 = vst [vmem:[%s264 + $0x80] sm:$0xff] %v1437
        %1694 = vst [vmem:[%s264 + $0x88] sm:$0xff] %v1438
        %1695 = vst [vmem:[%s264 + $0x90] sm:$0xff] %v1439
        %1696 = vst [vmem:[%s264 + $0x98] sm:$0xff] %v1440
        %1697 = vst [vmem:[%s264 + $0xa0] sm:$0xff] %v1441
        %1698 = vst [vmem:[%s264 + $0xa8] sm:$0xff] %v1442
        %1699 = vst [vmem:[%s264 + $0xb0] sm:$0xff] %v1443
        %1700 = vst [vmem:[%s264 + $0xb8] sm:$0xff] %v1444
        %1701 = vst [vmem:[%s264 + $0xc0] sm:$0xff] %v1445
        %1702 = vst [vmem:[%s264 + $0xc8] sm:$0xff] %v1446
        %1703 = vst [vmem:[%s264 + $0xd0] sm:$0xff] %v1447
        %1704 = vst [vmem:[%s264 + $0xd8] sm:$0xff] %v1448
        %1705 = vst [vmem:[%s264 + $0xe0] sm:$0xff] %v1449
        %1706 = vst [vmem:[%s264 + $0xe8] sm:$0xff] %v1450
        %1707 = vst [vmem:[%s264 + $0xf0] sm:$0xff] %v1451
        %1708 = vst [vmem:[%s264 + $0xf8] sm:$0xff] %v1452
        %1709 = vst [vmem:[%s264 + $0x100] sm:$0xff] %v1453
        %1710 = vst [vmem:[%s264 + $0x108] sm:$0xff] %v1454
        %1711 = vst [vmem:[%s264 + $0x110] sm:$0xff] %v1455
        %1712 = vst [vmem:[%s264 + $0x118] sm:$0xff] %v1456
        %1713 = vst [vmem:[%s264 + $0x120] sm:$0xff] %v1457
        %1714 = vst [vmem:[%s264 + $0x128] sm:$0xff] %v1458
        %1715 = vst [vmem:[%s264 + $0x130] sm:$0xff] %v1459
        %1716 = vst [vmem:[%s264 + $0x138] sm:$0xff] %v1460
        %1717 = vst [vmem:[%s264 + $0x140] sm:$0xff] %v1461
        %1718 = vst [vmem:[%s264 + $0x148] sm:$0xff] %v1462
        %1719 = vst [vmem:[%s264 + $0x150] sm:$0xff] %v1463
        %1720 = vst [vmem:[%s264 + $0x158] sm:$0xff] %v1464
        %1721 = vst [vmem:[%s264 + $0x160] sm:$0xff] %v1465
        %1722 = vst [vmem:[%s264 + $0x168] sm:$0xff] %v1466
        %1723 = vst [vmem:[%s264 + $0x170] sm:$0xff] %v1467
        %1724 = vst [vmem:[%s264 + $0x178] sm:$0xff] %v1468
        %1725 = vst [vmem:[%s264 + $0x180] sm:$0xff] %v1469
        %1726 = vst [vmem:[%s264 + $0x188] sm:$0xff] %v1470
        %1727 = vst [vmem:[%s264 + $0x190] sm:$0xff] %v1471
        %1728 = vst [vmem:[%s264 + $0x198] sm:$0xff] %v1472
        %1729 = vst [vmem:[%s264 + $0x1a0] sm:$0xff] %v1473
        %1730 = vst [vmem:[%s264 + $0x1a8] sm:$0xff] %v1474
        %1731 = vst [vmem:[%s264 + $0x1b0] sm:$0xff] %v1475
        %1732 = vst [vmem:[%s264 + $0x1b8] sm:$0xff] %v1476
        %1733 = vst [vmem:[%s264 + $0x1c0] sm:$0xff] %v1477
        %1734 = vst [vmem:[%s264 + $0x1c8] sm:$0xff] %v1478
        %1735 = vst [vmem:[%s264 + $0x1d0] sm:$0xff] %v1479
        %1736 = vst [vmem:[%s264 + $0x1d8] sm:$0xff] %v1480
        %1737 = vst [vmem:[%s264 + $0x1e0] sm:$0xff] %v1481
        %1738 = vst [vmem:[%s264 + $0x1e8] sm:$0xff] %v1482
        %1739 = vst [vmem:[%s264 + $0x1f0] sm:$0xff] %v1483
        %1740 = vst [vmem:[%s264 + $0x1f8] sm:$0xff] %v1484
        %1741 = vst [vmem:[%s264 + $0x200] sm:$0xff] %v1485
        %1742 = vst [vmem:[%s264 + $0x208] sm:$0xff] %v1486
        %1743 = vst [vmem:[%s264 + $0x210] sm:$0xff] %v1487
        %1744 = vst [vmem:[%s264 + $0x218] sm:$0xff] %v1488
        %1745 = vst [vmem:[%s264 + $0x220] sm:$0xff] %v1489
        %1746 = vst [vmem:[%s264 + $0x228] sm:$0xff] %v1490
        %1747 = vst [vmem:[%s264 + $0x230] sm:$0xff] %v1491
        %1748 = vst [vmem:[%s264 + $0x238] sm:$0xff] %v1492
        %1749 = vst [vmem:[%s264 + $0x240] sm:$0xff] %v1493
        %1750 = vst [vmem:[%s264 + $0x248] sm:$0xff] %v1494
        %1751 = vst [vmem:[%s264 + $0x250] sm:$0xff] %v1495
        %1752 = vst [vmem:[%s264 + $0x258] sm:$0xff] %v1496
        %1753 = vst [vmem:[%s264 + $0x260] sm:$0xff] %v1497
        %1754 = vst [vmem:[%s264 + $0x268] sm:$0xff] %v1498
        %1755 = vst [vmem:[%s264 + $0x270] sm:$0xff] %v1499
        %1756 = vst [vmem:[%s264 + $0x278] sm:$0xff] %v1500
        %1757 = vst [vmem:[%s264 + $0x280] sm:$0xff] %v1501
        %1758 = vst [vmem:[%s264 + $0x288] sm:$0xff] %v1502
        %1759 = vst [vmem:[%s264 + $0x290] sm:$0xff] %v1503
        %1760 = vst [vmem:[%s264 + $0x298] sm:$0xff] %v1504
        %1761 = vst [vmem:[%s264 + $0x2a0] sm:$0xff] %v1505
        %1762 = vst [vmem:[%s264 + $0x2a8] sm:$0xff] %v1506
        %1763 = vst [vmem:[%s264 + $0x2b0] sm:$0xff] %v1507
        %1764 = vst [vmem:[%s264 + $0x2b8] sm:$0xff] %v1508
        %1765 = vst [vmem:[%s264 + $0x2c0] sm:$0xff] %v1509
        %1766 = vst [vmem:[%s264 + $0x2c8] sm:$0xff] %v1510
        %1767 = vst [vmem:[%s264 + $0x2d0] sm:$0xff] %v1511
        %1768 = vst [vmem:[%s264 + $0x2d8] sm:$0xff] %v1512
        %1769 = vst [vmem:[%s264 + $0x2e0] sm:$0xff] %v1513
        %1770 = vst [vmem:[%s264 + $0x2e8] sm:$0xff] %v1514
        %1771 = vst [vmem:[%s264 + $0x2f0] sm:$0xff] %v1515
        %1772 = vst [vmem:[%s264 + $0x2f8] sm:$0xff] %v1516
        %1773 = vst [vmem:[%s264 + $0x300] sm:$0xff] %v1517
        %1774 = vst [vmem:[%s264 + $0x308] sm:$0xff] %v1518
        %1775 = vst [vmem:[%s264 + $0x310] sm:$0xff] %v1519
        %1776 = vst [vmem:[%s264 + $0x318] sm:$0xff] %v1520
        %1777 = vst [vmem:[%s264 + $0x320] sm:$0xff] %v1521
        %1778 = vst [vmem:[%s264 + $0x328] sm:$0xff] %v1522
        %1779 = vst [vmem:[%s264 + $0x330] sm:$0xff] %v1523
        %1780 = vst [vmem:[%s264 + $0x338] sm:$0xff] %v1524
        %1781 = vst [vmem:[%s264 + $0x340] sm:$0xff] %v1525
        %1782 = vst [vmem:[%s264 + $0x348] sm:$0xff] %v1526
        %1783 = vst [vmem:[%s264 + $0x350] sm:$0xff] %v1527
        %1784 = vst [vmem:[%s264 + $0x358] sm:$0xff] %v1528
        %1785 = vst [vmem:[%s264 + $0x360] sm:$0xff] %v1529
        %1786 = vst [vmem:[%s264 + $0x368] sm:$0xff] %v1530
        %1787 = vst [vmem:[%s264 + $0x370] sm:$0xff] %v1531
        %1788 = vst [vmem:[%s264 + $0x378] sm:$0xff] %v1532
        %1789 = vst [vmem:[%s264 + $0x380] sm:$0xff] %v1533
        %1790 = vst [vmem:[%s264 + $0x388] sm:$0xff] %v1534
        %1791 = vst [vmem:[%s264 + $0x390] sm:$0xff] %v1535
        %1792 = vst [vmem:[%s264 + $0x398] sm:$0xff] %v1536
        %1793 = vst [vmem:[%s264 + $0x3a0] sm:$0xff] %v1537
        %1794 = vst [vmem:[%s264 + $0x3a8] sm:$0xff] %v1538
        %1795 = vst [vmem:[%s264 + $0x3b0] sm:$0xff] %v1539
        %1796 = vst [vmem:[%s264 + $0x3b8] sm:$0xff] %v1540
        %1797 = vst [vmem:[%s264 + $0x3c0] sm:$0xff] %v1541
        %1798 = vst [vmem:[%s264 + $0x3c8] sm:$0xff] %v1542
        %1799 = vst [vmem:[%s264 + $0x3d0] sm:$0xff] %v1543
        %1800 = vst [vmem:[%s264 + $0x3d8] sm:$0xff] %v1544
        %1801 = vst [vmem:[%s264 + $0x3e0] sm:$0xff] %v1545
        %1802 = vst [vmem:[%s264 + $0x3e8] sm:$0xff] %v1546
        %1803 = vst [vmem:[%s264 + $0x3f0] sm:$0xff] %v1547
        %1804 = vst [vmem:[%s264 + $0x3f8] sm:$0xff] %v1548
        %1805 = vst [vmem:[%s264 + $0x400] sm:$0xff] %v1549
        %1806 = vst [vmem:[%s264 + $0x408] sm:$0xff] %v1550
        %1807 = vst [vmem:[%s264 + $0x410] sm:$0xff] %v1551
        %1808 = vst [vmem:[%s264 + $0x418] sm:$0xff] %v1552
        %1809 = vst [vmem:[%s264 + $0x420] sm:$0xff] %v1553
        %1810 = vst [vmem:[%s264 + $0x428] sm:$0xff] %v1554
        %1811 = vst [vmem:[%s264 + $0x430] sm:$0xff] %v1555
        %1812 = vst [vmem:[%s264 + $0x438] sm:$0xff] %v1556
        %1813 = vst [vmem:[%s264 + $0x440] sm:$0xff] %v1557
        %1814 = vst [vmem:[%s264 + $0x448] sm:$0xff] %v1558
        %1815 = vst [vmem:[%s264 + $0x450] sm:$0xff] %v1559
        %1816 = vst [vmem:[%s264 + $0x458] sm:$0xff] %v1560
        %1817 = vst [vmem:[%s264 + $0x460] sm:$0xff] %v1561
        %1818 = vst [vmem:[%s264 + $0x468] sm:$0xff] %v1562
        %1819 = vst [vmem:[%s264 + $0x470] sm:$0xff] %v1563
        %1820 = vst [vmem:[%s264 + $0x478] sm:$0xff] %v1564
        %1821 = vst [vmem:[%s264 + $0x480] sm:$0xff] %v1565
        %1822 = vst [vmem:[%s264 + $0x488] sm:$0xff] %v1566
        %1823 = vst [vmem:[%s264 + $0x490] sm:$0xff] %v1567
        %1824 = vst [vmem:[%s264 + $0x498] sm:$0xff] %v1568
        %1825 = vst [vmem:[%s264 + $0x4a0] sm:$0xff] %v1569
        %1826 = vst [vmem:[%s264 + $0x4a8] sm:$0xff] %v1570
        %1827 = vst [vmem:[%s264 + $0x4b0] sm:$0xff] %v1571
        %1828 = vst [vmem:[%s264 + $0x4b8] sm:$0xff] %v1572
        %1829 = vst [vmem:[%s264 + $0x4c0] sm:$0xff] %v1573
        %1830 = vst [vmem:[%s264 + $0x4c8] sm:$0xff] %v1574
        %1831 = vst [vmem:[%s264 + $0x4d0] sm:$0xff] %v1575
        %1832 = vst [vmem:[%s264 + $0x4d8] sm:$0xff] %v1576
        %1833 = vst [vmem:[%s264 + $0x4e0] sm:$0xff] %v1577
        %1834 = vst [vmem:[%s264 + $0x4e8] sm:$0xff] %v1578
        %1835 = vst [vmem:[%s264 + $0x4f0] sm:$0xff] %v1579
        %1836 = vst [vmem:[%s264 + $0x4f8] sm:$0xff] %v1580
        %1837 = vst [vmem:[%s264 + $0x500] sm:$0xff] %v1581
        %1838 = vst [vmem:[%s264 + $0x508] sm:$0xff] %v1582
        %1839 = vst [vmem:[%s264 + $0x510] sm:$0xff] %v1583
        %1840 = vst [vmem:[%s264 + $0x518] sm:$0xff] %v1584
        %1841 = vst [vmem:[%s264 + $0x520] sm:$0xff] %v1585
        %1842 = vst [vmem:[%s264 + $0x528] sm:$0xff] %v1586
        %1843 = vst [vmem:[%s264 + $0x530] sm:$0xff] %v1587
        %1844 = vst [vmem:[%s264 + $0x538] sm:$0xff] %v1588
        %1845 = vst [vmem:[%s264 + $0x540] sm:$0xff] %v1589
        %1846 = vst [vmem:[%s264 + $0x548] sm:$0xff] %v1590
        %1847 = vst [vmem:[%s264 + $0x550] sm:$0xff] %v1591
        %1848 = vst [vmem:[%s264 + $0x558] sm:$0xff] %v1592
        %1849 = vst [vmem:[%s264 + $0x560] sm:$0xff] %v1593
        %1850 = vst [vmem:[%s264 + $0x568] sm:$0xff] %v1594
        %1851 = vst [vmem:[%s264 + $0x570] sm:$0xff] %v1595
        %1852 = vst [vmem:[%s264 + $0x578] sm:$0xff] %v1596
        %1853 = vst [vmem:[%s264 + $0x580] sm:$0xff] %v1597
        %1854 = vst [vmem:[%s264 + $0x588] sm:$0xff] %v1598
        %1855 = vst [vmem:[%s264 + $0x590] sm:$0xff] %v1599
        %1856 = vst [vmem:[%s264 + $0x598] sm:$0xff] %v1600
        %1857 = vst [vmem:[%s264 + $0x5a0] sm:$0xff] %v1601
        %1858 = vst [vmem:[%s264 + $0x5a8] sm:$0xff] %v1602
        %1859 = vst [vmem:[%s264 + $0x5b0] sm:$0xff] %v1603
        %1860 = vst [vmem:[%s264 + $0x5b8] sm:$0xff] %v1604
        %1861 = vst [vmem:[%s264 + $0x5c0] sm:$0xff] %v1605
        %1862 = vst [vmem:[%s264 + $0x5c8] sm:$0xff] %v1606
        %1863 = vst [vmem:[%s264 + $0x5d0] sm:$0xff] %v1607
        %1864 = vst [vmem:[%s264 + $0x5d8] sm:$0xff] %v1608
        %1865 = vst [vmem:[%s264 + $0x5e0] sm:$0xff] %v1609
        %1866 = vst [vmem:[%s264 + $0x5e8] sm:$0xff] %v1610
        %1867 = vst [vmem:[%s264 + $0x5f0] sm:$0xff] %v1611
        %1868 = vst [vmem:[%s264 + $0x5f8] sm:$0xff] %v1612
        %1869 = vst [vmem:[%s264 + $0x600] sm:$0xff] %v1613
        %1870 = vst [vmem:[%s264 + $0x608] sm:$0xff] %v1614
        %1871 = vst [vmem:[%s264 + $0x610] sm:$0xff] %v1615
        %1872 = vst [vmem:[%s264 + $0x618] sm:$0xff] %v1616
        %1873 = vst [vmem:[%s264 + $0x620] sm:$0xff] %v1617
        %1874 = vst [vmem:[%s264 + $0x628] sm:$0xff] %v1618
        %1875 = vst [vmem:[%s264 + $0x630] sm:$0xff] %v1619
        %1876 = vst [vmem:[%s264 + $0x638] sm:$0xff] %v1620
        %1877 = vst [vmem:[%s264 + $0x640] sm:$0xff] %v1621
        %1878 = vst [vmem:[%s264 + $0x648] sm:$0xff] %v1622
        %1879 = vst [vmem:[%s264 + $0x650] sm:$0xff] %v1623
        %1880 = vst [vmem:[%s264 + $0x658] sm:$0xff] %v1624
        %1881 = vst [vmem:[%s264 + $0x660] sm:$0xff] %v1625
        %1882 = vst [vmem:[%s264 + $0x668] sm:$0xff] %v1626
        %1883 = vst [vmem:[%s264 + $0x670] sm:$0xff] %v1627
        %1884 = vst [vmem:[%s264 + $0x678] sm:$0xff] %v1628
        %1885 = vst [vmem:[%s264 + $0x680] sm:$0xff] %v1629
        %1886 = vst [vmem:[%s264 + $0x688] sm:$0xff] %v1630
        %1887 = vst [vmem:[%s264 + $0x690] sm:$0xff] %v1631
        %1888 = vst [vmem:[%s264 + $0x698] sm:$0xff] %v1632
        %1889 = vst [vmem:[%s264 + $0x6a0] sm:$0xff] %v1633
        %1890 = vst [vmem:[%s264 + $0x6a8] sm:$0xff] %v1634
        %1891 = vst [vmem:[%s264 + $0x6b0] sm:$0xff] %v1635
        %1892 = vst [vmem:[%s264 + $0x6b8] sm:$0xff] %v1636
        %1893 = vst [vmem:[%s264 + $0x6c0] sm:$0xff] %v1637
        %1894 = vst [vmem:[%s264 + $0x6c8] sm:$0xff] %v1638
        %1895 = vst [vmem:[%s264 + $0x6d0] sm:$0xff] %v1639
        %1896 = vst [vmem:[%s264 + $0x6d8] sm:$0xff] %v1640
        %1897 = vst [vmem:[%s264 + $0x6e0] sm:$0xff] %v1641
        %1898 = vst [vmem:[%s264 + $0x6e8] sm:$0xff] %v1642
        %1899 = vst [vmem:[%s264 + $0x6f0] sm:$0xff] %v1643
        %1900 = vst [vmem:[%s264 + $0x6f8] sm:$0xff] %v1644
        %1901 = vst [vmem:[%s264 + $0x700] sm:$0xff] %v1645
        %1902 = vst [vmem:[%s264 + $0x708] sm:$0xff] %v1646
        %1903 = vst [vmem:[%s264 + $0x710] sm:$0xff] %v1647
        %1904 = vst [vmem:[%s264 + $0x718] sm:$0xff] %v1648
        %1905 = vst [vmem:[%s264 + $0x720] sm:$0xff] %v1649
        %1906 = vst [vmem:[%s264 + $0x728] sm:$0xff] %v1650
        %1907 = vst [vmem:[%s264 + $0x730] sm:$0xff] %v1651
        %1908 = vst [vmem:[%s264 + $0x738] sm:$0xff] %v1652
        %1909 = vst [vmem:[%s264 + $0x740] sm:$0xff] %v1653
        %1910 = vst [vmem:[%s264 + $0x748] sm:$0xff] %v1654
        %1911 = vst [vmem:[%s264 + $0x750] sm:$0xff] %v1655
        %1912 = vst [vmem:[%s264 + $0x758] sm:$0xff] %v1656
        %1913 = vst [vmem:[%s264 + $0x760] sm:$0xff] %v1657
        %1914 = vst [vmem:[%s264 + $0x768] sm:$0xff] %v1658
        %1915 = vst [vmem:[%s264 + $0x770] sm:$0xff] %v1659
        %1916 = vst [vmem:[%s264 + $0x778] sm:$0xff] %v1660
        %1917 = vst [vmem:[%s264 + $0x780] sm:$0xff] %v1661
        %1918 = vst [vmem:[%s264 + $0x788] sm:$0xff] %v1662
        %1919 = vst [vmem:[%s264 + $0x790] sm:$0xff] %v1663
        %1920 = vst [vmem:[%s264 + $0x798] sm:$0xff] %v1664
        %1921 = vst [vmem:[%s264 + $0x7a0] sm:$0xff] %v1665
        %1922 = vst [vmem:[%s264 + $0x7a8] sm:$0xff] %v1666
        %1923 = vst [vmem:[%s264 + $0x7b0] sm:$0xff] %v1667
        %1924 = vst [vmem:[%s264 + $0x7b8] sm:$0xff] %v1668
        %1925 = vst [vmem:[%s264 + $0x7c0] sm:$0xff] %v1669
        %1926 = vst [vmem:[%s264 + $0x7c8] sm:$0xff] %v1670
        %1927 = vst [vmem:[%s264 + $0x7d0] sm:$0xff] %v1671
        %1928 = vst [vmem:[%s264 + $0x7d8] sm:$0xff] %v1672
        %1929 = vst [vmem:[%s264 + $0x7e0] sm:$0xff] %v1673
        %1930 = vst [vmem:[%s264 + $0x7e8] sm:$0xff] %v1674
        %1931 = vst [vmem:[%s264 + $0x7f0] sm:$0xff] %v1675
        %1932 = vst [vmem:[%s264 + $0x7f8] sm:$0xff] %v1676
        %s1933 = sand.u32 %s106, 1
        %s1934 = sand.u32 %s106, 1
        %s1935 = smul.addr %s1934, 2048
        %s1936 = scalar_lea.vmem [#allocation3], %s1935
        // Predicated region
        $region56: #{deconv2x2x2_relu.1} parent=50 // pred_check
          %p1937 = pneg %p116
        $region57: #{deconv2x2x2_relu.1} parent=50 // pred_check_branch
          %1939 = sbr.rel (%p1937) target = $region59
        $region58: #{deconv2x2x2_relu.1} parent=50 // pred_region
          %s1940 = smul.u32 16, %s19
          %s1941 = smul.addr %s18, 512
          %s1942 = sadd.s32 %s1940, %s1941
          %s1943 = smul.addr %s1942, 8
          %s1944 = scalar_lea.vmem %s3, %s1943
          // Predicated region
          $region60: #{deconv2x2x2_relu.1} parent=58 // pred_check
            _
          $region61: #{deconv2x2x2_relu.1} parent=58 // pred_check_branch
            %1946 = sbr.rel (0) target = $region63
          $region62: #{deconv2x2x2_relu.1} parent=58 // pred_region
            // Predicated region
            $region64: #{deconv2x2x2_relu.1} parent=62 // pred_check
              _
            $region65: #{deconv2x2x2_relu.1} parent=62 // pred_check_branch
              %1948 = sbr.rel (0) target = $region67
            $region66: #{deconv2x2x2_relu.1} parent=62 // pred_region
              loop: start=0, step=1, limit=1
              $region68: #{deconv2x2x2_relu.1} parent=66 // loop_pre_header
                _
              $region69: #{deconv2x2x2_relu.1} parent=66 // loop_header
                %s1950 = sphi 0, %s1954
                %p1951 = scmp.ge.s32.totalorder %s1950, 1
                %s1955 = sphi %s1936, %s1936
                %s1956 = sphi %s1944, %s1944
              $region70: #{deconv2x2x2_relu.1} parent=66 // loop_header_branch
                %1953 = sbr.rel (%p1951) target = $region74
              $region71: #{deconv2x2x2_relu.1} parent=66 // loop_body
                %v1957 = vld [vmem:[%s1955] sm:$0xff]
                %1958 = vst [vmem:[%s1956] sm:$0xff] %v1957
                %v1959 = vld [vmem:[%s1955 + $0x8] sm:$0xff]
                %1960 = vst [vmem:[%s1956 + $0x8] sm:$0xff] %v1959
                %v1961 = vld [vmem:[%s1955 + $0x10] sm:$0xff]
                %1962 = vst [vmem:[%s1956 + $0x10] sm:$0xff] %v1961
                %v1963 = vld [vmem:[%s1955 + $0x18] sm:$0xff]
                %1964 = vst [vmem:[%s1956 + $0x18] sm:$0xff] %v1963
                %v1965 = vld [vmem:[%s1955 + $0x20] sm:$0xff]
                %1966 = vst [vmem:[%s1956 + $0x20] sm:$0xff] %v1965
                %v1967 = vld [vmem:[%s1955 + $0x28] sm:$0xff]
                %1968 = vst [vmem:[%s1956 + $0x28] sm:$0xff] %v1967
                %v1969 = vld [vmem:[%s1955 + $0x30] sm:$0xff]
                %1970 = vst [vmem:[%s1956 + $0x30] sm:$0xff] %v1969
                %v1971 = vld [vmem:[%s1955 + $0x38] sm:$0xff]
                %1972 = vst [vmem:[%s1956 + $0x38] sm:$0xff] %v1971
                %v1973 = vld [vmem:[%s1955 + $0x40] sm:$0xff]
                %1974 = vst [vmem:[%s1956 + $0x40] sm:$0xff] %v1973
                %v1975 = vld [vmem:[%s1955 + $0x48] sm:$0xff]
                %1976 = vst [vmem:[%s1956 + $0x48] sm:$0xff] %v1975
                %v1977 = vld [vmem:[%s1955 + $0x50] sm:$0xff]
                %1978 = vst [vmem:[%s1956 + $0x50] sm:$0xff] %v1977
                %v1979 = vld [vmem:[%s1955 + $0x58] sm:$0xff]
                %1980 = vst [vmem:[%s1956 + $0x58] sm:$0xff] %v1979
                %v1981 = vld [vmem:[%s1955 + $0x60] sm:$0xff]
                %1982 = vst [vmem:[%s1956 + $0x60] sm:$0xff] %v1981
                %v1983 = vld [vmem:[%s1955 + $0x68] sm:$0xff]
                %1984 = vst [vmem:[%s1956 + $0x68] sm:$0xff] %v1983
                %v1985 = vld [vmem:[%s1955 + $0x70] sm:$0xff]
                %1986 = vst [vmem:[%s1956 + $0x70] sm:$0xff] %v1985
                %v1987 = vld [vmem:[%s1955 + $0x78] sm:$0xff]
                %1988 = vst [vmem:[%s1956 + $0x78] sm:$0xff] %v1987
                %v1989 = vld [vmem:[%s1955 + $0x80] sm:$0xff]
                %1990 = vst [vmem:[%s1956 + $0x100] sm:$0xff] %v1989
                %v1991 = vld [vmem:[%s1955 + $0x88] sm:$0xff]
                %1992 = vst [vmem:[%s1956 + $0x108] sm:$0xff] %v1991
                %v1993 = vld [vmem:[%s1955 + $0x90] sm:$0xff]
                %1994 = vst [vmem:[%s1956 + $0x110] sm:$0xff] %v1993
                %v1995 = vld [vmem:[%s1955 + $0x98] sm:$0xff]
                %1996 = vst [vmem:[%s1956 + $0x118] sm:$0xff] %v1995
                %v1997 = vld [vmem:[%s1955 + $0xa0] sm:$0xff]
                %1998 = vst [vmem:[%s1956 + $0x120] sm:$0xff] %v1997
                %v1999 = vld [vmem:[%s1955 + $0xa8] sm:$0xff]
                %2000 = vst [vmem:[%s1956 + $0x128] sm:$0xff] %v1999
                %v2001 = vld [vmem:[%s1955 + $0xb0] sm:$0xff]
                %2002 = vst [vmem:[%s1956 + $0x130] sm:$0xff] %v2001
                %v2003 = vld [vmem:[%s1955 + $0xb8] sm:$0xff]
                %2004 = vst [vmem:[%s1956 + $0x138] sm:$0xff] %v2003
                %v2005 = vld [vmem:[%s1955 + $0xc0] sm:$0xff]
                %2006 = vst [vmem:[%s1956 + $0x140] sm:$0xff] %v2005
                %v2007 = vld [vmem:[%s1955 + $0xc8] sm:$0xff]
                %2008 = vst [vmem:[%s1956 + $0x148] sm:$0xff] %v2007
                %v2009 = vld [vmem:[%s1955 + $0xd0] sm:$0xff]
                %2010 = vst [vmem:[%s1956 + $0x150] sm:$0xff] %v2009
                %v2011 = vld [vmem:[%s1955 + $0xd8] sm:$0xff]
                %2012 = vst [vmem:[%s1956 + $0x158] sm:$0xff] %v2011
                %v2013 = vld [vmem:[%s1955 + $0xe0] sm:$0xff]
                %2014 = vst [vmem:[%s1956 + $0x160] sm:$0xff] %v2013
                %v2015 = vld [vmem:[%s1955 + $0xe8] sm:$0xff]
                %2016 = vst [vmem:[%s1956 + $0x168] sm:$0xff] %v2015
                %v2017 = vld [vmem:[%s1955 + $0xf0] sm:$0xff]
                %2018 = vst [vmem:[%s1956 + $0x170] sm:$0xff] %v2017
                %v2019 = vld [vmem:[%s1955 + $0xf8] sm:$0xff]
                %2020 = vst [vmem:[%s1956 + $0x178] sm:$0xff] %v2019
                %v2021 = vld [vmem:[%s1955 + $0x100] sm:$0xff]
                %2022 = vst [vmem:[%s1956 + $0x200] sm:$0xff] %v2021
                %v2023 = vld [vmem:[%s1955 + $0x108] sm:$0xff]
                %2024 = vst [vmem:[%s1956 + $0x208] sm:$0xff] %v2023
                %v2025 = vld [vmem:[%s1955 + $0x110] sm:$0xff]
                %2026 = vst [vmem:[%s1956 + $0x210] sm:$0xff] %v2025
                %v2027 = vld [vmem:[%s1955 + $0x118] sm:$0xff]
                %2028 = vst [vmem:[%s1956 + $0x218] sm:$0xff] %v2027
                %v2029 = vld [vmem:[%s1955 + $0x120] sm:$0xff]
                %2030 = vst [vmem:[%s1956 + $0x220] sm:$0xff] %v2029
                %v2031 = vld [vmem:[%s1955 + $0x128] sm:$0xff]
                %2032 = vst [vmem:[%s1956 + $0x228] sm:$0xff] %v2031
                %v2033 = vld [vmem:[%s1955 + $0x130] sm:$0xff]
                %2034 = vst [vmem:[%s1956 + $0x230] sm:$0xff] %v2033
                %v2035 = vld [vmem:[%s1955 + $0x138] sm:$0xff]
                %2036 = vst [vmem:[%s1956 + $0x238] sm:$0xff] %v2035
                %v2037 = vld [vmem:[%s1955 + $0x140] sm:$0xff]
                %2038 = vst [vmem:[%s1956 + $0x240] sm:$0xff] %v2037
                %v2039 = vld [vmem:[%s1955 + $0x148] sm:$0xff]
                %2040 = vst [vmem:[%s1956 + $0x248] sm:$0xff] %v2039
                %v2041 = vld [vmem:[%s1955 + $0x150] sm:$0xff]
                %2042 = vst [vmem:[%s1956 + $0x250] sm:$0xff] %v2041
                %v2043 = vld [vmem:[%s1955 + $0x158] sm:$0xff]
                %2044 = vst [vmem:[%s1956 + $0x258] sm:$0xff] %v2043
                %v2045 = vld [vmem:[%s1955 + $0x160] sm:$0xff]
                %2046 = vst [vmem:[%s1956 + $0x260] sm:$0xff] %v2045
                %v2047 = vld [vmem:[%s1955 + $0x168] sm:$0xff]
                %2048 = vst [vmem:[%s1956 + $0x268] sm:$0xff] %v2047
                %v2049 = vld [vmem:[%s1955 + $0x170] sm:$0xff]
                %2050 = vst [vmem:[%s1956 + $0x270] sm:$0xff] %v2049
                %v2051 = vld [vmem:[%s1955 + $0x178] sm:$0xff]
                %2052 = vst [vmem:[%s1956 + $0x278] sm:$0xff] %v2051
                %v2053 = vld [vmem:[%s1955 + $0x180] sm:$0xff]
                %2054 = vst [vmem:[%s1956 + $0x300] sm:$0xff] %v2053
                %v2055 = vld [vmem:[%s1955 + $0x188] sm:$0xff]
                %2056 = vst [vmem:[%s1956 + $0x308] sm:$0xff] %v2055
                %v2057 = vld [vmem:[%s1955 + $0x190] sm:$0xff]
                %2058 = vst [vmem:[%s1956 + $0x310] sm:$0xff] %v2057
                %v2059 = vld [vmem:[%s1955 + $0x198] sm:$0xff]
                %2060 = vst [vmem:[%s1956 + $0x318] sm:$0xff] %v2059
                %v2061 = vld [vmem:[%s1955 + $0x1a0] sm:$0xff]
                %2062 = vst [vmem:[%s1956 + $0x320] sm:$0xff] %v2061
                %v2063 = vld [vmem:[%s1955 + $0x1a8] sm:$0xff]
                %2064 = vst [vmem:[%s1956 + $0x328] sm:$0xff] %v2063
                %v2065 = vld [vmem:[%s1955 + $0x1b0] sm:$0xff]
                %2066 = vst [vmem:[%s1956 + $0x330] sm:$0xff] %v2065
                %v2067 = vld [vmem:[%s1955 + $0x1b8] sm:$0xff]
                %2068 = vst [vmem:[%s1956 + $0x338] sm:$0xff] %v2067
                %v2069 = vld [vmem:[%s1955 + $0x1c0] sm:$0xff]
                %2070 = vst [vmem:[%s1956 + $0x340] sm:$0xff] %v2069
                %v2071 = vld [vmem:[%s1955 + $0x1c8] sm:$0xff]
                %2072 = vst [vmem:[%s1956 + $0x348] sm:$0xff] %v2071
                %v2073 = vld [vmem:[%s1955 + $0x1d0] sm:$0xff]
                %2074 = vst [vmem:[%s1956 + $0x350] sm:$0xff] %v2073
                %v2075 = vld [vmem:[%s1955 + $0x1d8] sm:$0xff]
                %2076 = vst [vmem:[%s1956 + $0x358] sm:$0xff] %v2075
                %v2077 = vld [vmem:[%s1955 + $0x1e0] sm:$0xff]
                %2078 = vst [vmem:[%s1956 + $0x360] sm:$0xff] %v2077
                %v2079 = vld [vmem:[%s1955 + $0x1e8] sm:$0xff]
                %2080 = vst [vmem:[%s1956 + $0x368] sm:$0xff] %v2079
                %v2081 = vld [vmem:[%s1955 + $0x1f0] sm:$0xff]
                %2082 = vst [vmem:[%s1956 + $0x370] sm:$0xff] %v2081
                %v2083 = vld [vmem:[%s1955 + $0x1f8] sm:$0xff]
                %2084 = vst [vmem:[%s1956 + $0x378] sm:$0xff] %v2083
                %v2085 = vld [vmem:[%s1955 + $0x200] sm:$0xff]
                %2086 = vst [vmem:[%s1956 + $0x400] sm:$0xff] %v2085
                %v2087 = vld [vmem:[%s1955 + $0x208] sm:$0xff]
                %2088 = vst [vmem:[%s1956 + $0x408] sm:$0xff] %v2087
                %v2089 = vld [vmem:[%s1955 + $0x210] sm:$0xff]
                %2090 = vst [vmem:[%s1956 + $0x410] sm:$0xff] %v2089
                %v2091 = vld [vmem:[%s1955 + $0x218] sm:$0xff]
                %2092 = vst [vmem:[%s1956 + $0x418] sm:$0xff] %v2091
                %v2093 = vld [vmem:[%s1955 + $0x220] sm:$0xff]
                %2094 = vst [vmem:[%s1956 + $0x420] sm:$0xff] %v2093
                %v2095 = vld [vmem:[%s1955 + $0x228] sm:$0xff]
                %2096 = vst [vmem:[%s1956 + $0x428] sm:$0xff] %v2095
                %v2097 = vld [vmem:[%s1955 + $0x230] sm:$0xff]
                %2098 = vst [vmem:[%s1956 + $0x430] sm:$0xff] %v2097
                %v2099 = vld [vmem:[%s1955 + $0x238] sm:$0xff]
                %2100 = vst [vmem:[%s1956 + $0x438] sm:$0xff] %v2099
                %v2101 = vld [vmem:[%s1955 + $0x240] sm:$0xff]
                %2102 = vst [vmem:[%s1956 + $0x440] sm:$0xff] %v2101
                %v2103 = vld [vmem:[%s1955 + $0x248] sm:$0xff]
                %2104 = vst [vmem:[%s1956 + $0x448] sm:$0xff] %v2103
                %v2105 = vld [vmem:[%s1955 + $0x250] sm:$0xff]
                %2106 = vst [vmem:[%s1956 + $0x450] sm:$0xff] %v2105
                %v2107 = vld [vmem:[%s1955 + $0x258] sm:$0xff]
                %2108 = vst [vmem:[%s1956 + $0x458] sm:$0xff] %v2107
                %v2109 = vld [vmem:[%s1955 + $0x260] sm:$0xff]
                %2110 = vst [vmem:[%s1956 + $0x460] sm:$0xff] %v2109
                %v2111 = vld [vmem:[%s1955 + $0x268] sm:$0xff]
                %2112 = vst [vmem:[%s1956 + $0x468] sm:$0xff] %v2111
                %v2113 = vld [vmem:[%s1955 + $0x270] sm:$0xff]
                %2114 = vst [vmem:[%s1956 + $0x470] sm:$0xff] %v2113
                %v2115 = vld [vmem:[%s1955 + $0x278] sm:$0xff]
                %2116 = vst [vmem:[%s1956 + $0x478] sm:$0xff] %v2115
                %v2117 = vld [vmem:[%s1955 + $0x280] sm:$0xff]
                %2118 = vst [vmem:[%s1956 + $0x500] sm:$0xff] %v2117
                %v2119 = vld [vmem:[%s1955 + $0x288] sm:$0xff]
                %2120 = vst [vmem:[%s1956 + $0x508] sm:$0xff] %v2119
                %v2121 = vld [vmem:[%s1955 + $0x290] sm:$0xff]
                %2122 = vst [vmem:[%s1956 + $0x510] sm:$0xff] %v2121
                %v2123 = vld [vmem:[%s1955 + $0x298] sm:$0xff]
                %2124 = vst [vmem:[%s1956 + $0x518] sm:$0xff] %v2123
                %v2125 = vld [vmem:[%s1955 + $0x2a0] sm:$0xff]
                %2126 = vst [vmem:[%s1956 + $0x520] sm:$0xff] %v2125
                %v2127 = vld [vmem:[%s1955 + $0x2a8] sm:$0xff]
                %2128 = vst [vmem:[%s1956 + $0x528] sm:$0xff] %v2127
                %v2129 = vld [vmem:[%s1955 + $0x2b0] sm:$0xff]
                %2130 = vst [vmem:[%s1956 + $0x530] sm:$0xff] %v2129
                %v2131 = vld [vmem:[%s1955 + $0x2b8] sm:$0xff]
                %2132 = vst [vmem:[%s1956 + $0x538] sm:$0xff] %v2131
                %v2133 = vld [vmem:[%s1955 + $0x2c0] sm:$0xff]
                %2134 = vst [vmem:[%s1956 + $0x540] sm:$0xff] %v2133
                %v2135 = vld [vmem:[%s1955 + $0x2c8] sm:$0xff]
                %2136 = vst [vmem:[%s1956 + $0x548] sm:$0xff] %v2135
                %v2137 = vld [vmem:[%s1955 + $0x2d0] sm:$0xff]
                %2138 = vst [vmem:[%s1956 + $0x550] sm:$0xff] %v2137
                %v2139 = vld [vmem:[%s1955 + $0x2d8] sm:$0xff]
                %2140 = vst [vmem:[%s1956 + $0x558] sm:$0xff] %v2139
                %v2141 = vld [vmem:[%s1955 + $0x2e0] sm:$0xff]
                %2142 = vst [vmem:[%s1956 + $0x560] sm:$0xff] %v2141
                %v2143 = vld [vmem:[%s1955 + $0x2e8] sm:$0xff]
                %2144 = vst [vmem:[%s1956 + $0x568] sm:$0xff] %v2143
                %v2145 = vld [vmem:[%s1955 + $0x2f0] sm:$0xff]
                %2146 = vst [vmem:[%s1956 + $0x570] sm:$0xff] %v2145
                %v2147 = vld [vmem:[%s1955 + $0x2f8] sm:$0xff]
                %2148 = vst [vmem:[%s1956 + $0x578] sm:$0xff] %v2147
                %v2149 = vld [vmem:[%s1955 + $0x300] sm:$0xff]
                %2150 = vst [vmem:[%s1956 + $0x600] sm:$0xff] %v2149
                %v2151 = vld [vmem:[%s1955 + $0x308] sm:$0xff]
                %2152 = vst [vmem:[%s1956 + $0x608] sm:$0xff] %v2151
                %v2153 = vld [vmem:[%s1955 + $0x310] sm:$0xff]
                %2154 = vst [vmem:[%s1956 + $0x610] sm:$0xff] %v2153
                %v2155 = vld [vmem:[%s1955 + $0x318] sm:$0xff]
                %2156 = vst [vmem:[%s1956 + $0x618] sm:$0xff] %v2155
                %v2157 = vld [vmem:[%s1955 + $0x320] sm:$0xff]
                %2158 = vst [vmem:[%s1956 + $0x620] sm:$0xff] %v2157
                %v2159 = vld [vmem:[%s1955 + $0x328] sm:$0xff]
                %2160 = vst [vmem:[%s1956 + $0x628] sm:$0xff] %v2159
                %v2161 = vld [vmem:[%s1955 + $0x330] sm:$0xff]
                %2162 = vst [vmem:[%s1956 + $0x630] sm:$0xff] %v2161
                %v2163 = vld [vmem:[%s1955 + $0x338] sm:$0xff]
                %2164 = vst [vmem:[%s1956 + $0x638] sm:$0xff] %v2163
                %v2165 = vld [vmem:[%s1955 + $0x340] sm:$0xff]
                %2166 = vst [vmem:[%s1956 + $0x640] sm:$0xff] %v2165
                %v2167 = vld [vmem:[%s1955 + $0x348] sm:$0xff]
                %2168 = vst [vmem:[%s1956 + $0x648] sm:$0xff] %v2167
                %v2169 = vld [vmem:[%s1955 + $0x350] sm:$0xff]
                %2170 = vst [vmem:[%s1956 + $0x650] sm:$0xff] %v2169
                %v2171 = vld [vmem:[%s1955 + $0x358] sm:$0xff]
                %2172 = vst [vmem:[%s1956 + $0x658] sm:$0xff] %v2171
                %v2173 = vld [vmem:[%s1955 + $0x360] sm:$0xff]
                %2174 = vst [vmem:[%s1956 + $0x660] sm:$0xff] %v2173
                %v2175 = vld [vmem:[%s1955 + $0x368] sm:$0xff]
                %2176 = vst [vmem:[%s1956 + $0x668] sm:$0xff] %v2175
                %v2177 = vld [vmem:[%s1955 + $0x370] sm:$0xff]
                %2178 = vst [vmem:[%s1956 + $0x670] sm:$0xff] %v2177
                %v2179 = vld [vmem:[%s1955 + $0x378] sm:$0xff]
                %2180 = vst [vmem:[%s1956 + $0x678] sm:$0xff] %v2179
                %v2181 = vld [vmem:[%s1955 + $0x380] sm:$0xff]
                %2182 = vst [vmem:[%s1956 + $0x700] sm:$0xff] %v2181
                %v2183 = vld [vmem:[%s1955 + $0x388] sm:$0xff]
                %2184 = vst [vmem:[%s1956 + $0x708] sm:$0xff] %v2183
                %v2185 = vld [vmem:[%s1955 + $0x390] sm:$0xff]
                %2186 = vst [vmem:[%s1956 + $0x710] sm:$0xff] %v2185
                %v2187 = vld [vmem:[%s1955 + $0x398] sm:$0xff]
                %2188 = vst [vmem:[%s1956 + $0x718] sm:$0xff] %v2187
                %v2189 = vld [vmem:[%s1955 + $0x3a0] sm:$0xff]
                %2190 = vst [vmem:[%s1956 + $0x720] sm:$0xff] %v2189
                %v2191 = vld [vmem:[%s1955 + $0x3a8] sm:$0xff]
                %2192 = vst [vmem:[%s1956 + $0x728] sm:$0xff] %v2191
                %v2193 = vld [vmem:[%s1955 + $0x3b0] sm:$0xff]
                %2194 = vst [vmem:[%s1956 + $0x730] sm:$0xff] %v2193
                %v2195 = vld [vmem:[%s1955 + $0x3b8] sm:$0xff]
                %2196 = vst [vmem:[%s1956 + $0x738] sm:$0xff] %v2195
                %v2197 = vld [vmem:[%s1955 + $0x3c0] sm:$0xff]
                %2198 = vst [vmem:[%s1956 + $0x740] sm:$0xff] %v2197
                %v2199 = vld [vmem:[%s1955 + $0x3c8] sm:$0xff]
                %2200 = vst [vmem:[%s1956 + $0x748] sm:$0xff] %v2199
                %v2201 = vld [vmem:[%s1955 + $0x3d0] sm:$0xff]
                %2202 = vst [vmem:[%s1956 + $0x750] sm:$0xff] %v2201
                %v2203 = vld [vmem:[%s1955 + $0x3d8] sm:$0xff]
                %2204 = vst [vmem:[%s1956 + $0x758] sm:$0xff] %v2203
                %v2205 = vld [vmem:[%s1955 + $0x3e0] sm:$0xff]
                %2206 = vst [vmem:[%s1956 + $0x760] sm:$0xff] %v2205
                %v2207 = vld [vmem:[%s1955 + $0x3e8] sm:$0xff]
                %2208 = vst [vmem:[%s1956 + $0x768] sm:$0xff] %v2207
                %v2209 = vld [vmem:[%s1955 + $0x3f0] sm:$0xff]
                %2210 = vst [vmem:[%s1956 + $0x770] sm:$0xff] %v2209
                %v2211 = vld [vmem:[%s1955 + $0x3f8] sm:$0xff]
                %2212 = vst [vmem:[%s1956 + $0x778] sm:$0xff] %v2211
                %v2213 = vld [vmem:[%s1955 + $0x400] sm:$0xff]
                %2214 = vst [vmem:[%s1956 + $0x800] sm:$0xff] %v2213
                %v2215 = vld [vmem:[%s1955 + $0x408] sm:$0xff]
                %2216 = vst [vmem:[%s1956 + $0x808] sm:$0xff] %v2215
                %v2217 = vld [vmem:[%s1955 + $0x410] sm:$0xff]
                %2218 = vst [vmem:[%s1956 + $0x810] sm:$0xff] %v2217
                %v2219 = vld [vmem:[%s1955 + $0x418] sm:$0xff]
                %2220 = vst [vmem:[%s1956 + $0x818] sm:$0xff] %v2219
                %v2221 = vld [vmem:[%s1955 + $0x420] sm:$0xff]
                %2222 = vst [vmem:[%s1956 + $0x820] sm:$0xff] %v2221
                %v2223 = vld [vmem:[%s1955 + $0x428] sm:$0xff]
                %2224 = vst [vmem:[%s1956 + $0x828] sm:$0xff] %v2223
                %v2225 = vld [vmem:[%s1955 + $0x430] sm:$0xff]
                %2226 = vst [vmem:[%s1956 + $0x830] sm:$0xff] %v2225
                %v2227 = vld [vmem:[%s1955 + $0x438] sm:$0xff]
                %2228 = vst [vmem:[%s1956 + $0x838] sm:$0xff] %v2227
                %v2229 = vld [vmem:[%s1955 + $0x440] sm:$0xff]
                %2230 = vst [vmem:[%s1956 + $0x840] sm:$0xff] %v2229
                %v2231 = vld [vmem:[%s1955 + $0x448] sm:$0xff]
                %2232 = vst [vmem:[%s1956 + $0x848] sm:$0xff] %v2231
                %v2233 = vld [vmem:[%s1955 + $0x450] sm:$0xff]
                %2234 = vst [vmem:[%s1956 + $0x850] sm:$0xff] %v2233
                %v2235 = vld [vmem:[%s1955 + $0x458] sm:$0xff]
                %2236 = vst [vmem:[%s1956 + $0x858] sm:$0xff] %v2235
                %v2237 = vld [vmem:[%s1955 + $0x460] sm:$0xff]
                %2238 = vst [vmem:[%s1956 + $0x860] sm:$0xff] %v2237
                %v2239 = vld [vmem:[%s1955 + $0x468] sm:$0xff]
                %2240 = vst [vmem:[%s1956 + $0x868] sm:$0xff] %v2239
                %v2241 = vld [vmem:[%s1955 + $0x470] sm:$0xff]
                %2242 = vst [vmem:[%s1956 + $0x870] sm:$0xff] %v2241
                %v2243 = vld [vmem:[%s1955 + $0x478] sm:$0xff]
                %2244 = vst [vmem:[%s1956 + $0x878] sm:$0xff] %v2243
                %v2245 = vld [vmem:[%s1955 + $0x480] sm:$0xff]
                %2246 = vst [vmem:[%s1956 + $0x900] sm:$0xff] %v2245
                %v2247 = vld [vmem:[%s1955 + $0x488] sm:$0xff]
                %2248 = vst [vmem:[%s1956 + $0x908] sm:$0xff] %v2247
                %v2249 = vld [vmem:[%s1955 + $0x490] sm:$0xff]
                %2250 = vst [vmem:[%s1956 + $0x910] sm:$0xff] %v2249
                %v2251 = vld [vmem:[%s1955 + $0x498] sm:$0xff]
                %2252 = vst [vmem:[%s1956 + $0x918] sm:$0xff] %v2251
                %v2253 = vld [vmem:[%s1955 + $0x4a0] sm:$0xff]
                %2254 = vst [vmem:[%s1956 + $0x920] sm:$0xff] %v2253
                %v2255 = vld [vmem:[%s1955 + $0x4a8] sm:$0xff]
                %2256 = vst [vmem:[%s1956 + $0x928] sm:$0xff] %v2255
                %v2257 = vld [vmem:[%s1955 + $0x4b0] sm:$0xff]
                %2258 = vst [vmem:[%s1956 + $0x930] sm:$0xff] %v2257
                %v2259 = vld [vmem:[%s1955 + $0x4b8] sm:$0xff]
                %2260 = vst [vmem:[%s1956 + $0x938] sm:$0xff] %v2259
                %v2261 = vld [vmem:[%s1955 + $0x4c0] sm:$0xff]
                %2262 = vst [vmem:[%s1956 + $0x940] sm:$0xff] %v2261
                %v2263 = vld [vmem:[%s1955 + $0x4c8] sm:$0xff]
                %2264 = vst [vmem:[%s1956 + $0x948] sm:$0xff] %v2263
                %v2265 = vld [vmem:[%s1955 + $0x4d0] sm:$0xff]
                %2266 = vst [vmem:[%s1956 + $0x950] sm:$0xff] %v2265
                %v2267 = vld [vmem:[%s1955 + $0x4d8] sm:$0xff]
                %2268 = vst [vmem:[%s1956 + $0x958] sm:$0xff] %v2267
                %v2269 = vld [vmem:[%s1955 + $0x4e0] sm:$0xff]
                %2270 = vst [vmem:[%s1956 + $0x960] sm:$0xff] %v2269
                %v2271 = vld [vmem:[%s1955 + $0x4e8] sm:$0xff]
                %2272 = vst [vmem:[%s1956 + $0x968] sm:$0xff] %v2271
                %v2273 = vld [vmem:[%s1955 + $0x4f0] sm:$0xff]
                %2274 = vst [vmem:[%s1956 + $0x970] sm:$0xff] %v2273
                %v2275 = vld [vmem:[%s1955 + $0x4f8] sm:$0xff]
                %2276 = vst [vmem:[%s1956 + $0x978] sm:$0xff] %v2275
                %v2277 = vld [vmem:[%s1955 + $0x500] sm:$0xff]
                %2278 = vst [vmem:[%s1956 + $0xa00] sm:$0xff] %v2277
                %v2279 = vld [vmem:[%s1955 + $0x508] sm:$0xff]
                %2280 = vst [vmem:[%s1956 + $0xa08] sm:$0xff] %v2279
                %v2281 = vld [vmem:[%s1955 + $0x510] sm:$0xff]
                %2282 = vst [vmem:[%s1956 + $0xa10] sm:$0xff] %v2281
                %v2283 = vld [vmem:[%s1955 + $0x518] sm:$0xff]
                %2284 = vst [vmem:[%s1956 + $0xa18] sm:$0xff] %v2283
                %v2285 = vld [vmem:[%s1955 + $0x520] sm:$0xff]
                %2286 = vst [vmem:[%s1956 + $0xa20] sm:$0xff] %v2285
                %v2287 = vld [vmem:[%s1955 + $0x528] sm:$0xff]
                %2288 = vst [vmem:[%s1956 + $0xa28] sm:$0xff] %v2287
                %v2289 = vld [vmem:[%s1955 + $0x530] sm:$0xff]
                %2290 = vst [vmem:[%s1956 + $0xa30] sm:$0xff] %v2289
                %v2291 = vld [vmem:[%s1955 + $0x538] sm:$0xff]
                %2292 = vst [vmem:[%s1956 + $0xa38] sm:$0xff] %v2291
                %v2293 = vld [vmem:[%s1955 + $0x540] sm:$0xff]
                %2294 = vst [vmem:[%s1956 + $0xa40] sm:$0xff] %v2293
                %v2295 = vld [vmem:[%s1955 + $0x548] sm:$0xff]
                %2296 = vst [vmem:[%s1956 + $0xa48] sm:$0xff] %v2295
                %v2297 = vld [vmem:[%s1955 + $0x550] sm:$0xff]
                %2298 = vst [vmem:[%s1956 + $0xa50] sm:$0xff] %v2297
                %v2299 = vld [vmem:[%s1955 + $0x558] sm:$0xff]
                %2300 = vst [vmem:[%s1956 + $0xa58] sm:$0xff] %v2299
                %v2301 = vld [vmem:[%s1955 + $0x560] sm:$0xff]
                %2302 = vst [vmem:[%s1956 + $0xa60] sm:$0xff] %v2301
                %v2303 = vld [vmem:[%s1955 + $0x568] sm:$0xff]
                %2304 = vst [vmem:[%s1956 + $0xa68] sm:$0xff] %v2303
                %v2305 = vld [vmem:[%s1955 + $0x570] sm:$0xff]
                %2306 = vst [vmem:[%s1956 + $0xa70] sm:$0xff] %v2305
                %v2307 = vld [vmem:[%s1955 + $0x578] sm:$0xff]
                %2308 = vst [vmem:[%s1956 + $0xa78] sm:$0xff] %v2307
                %v2309 = vld [vmem:[%s1955 + $0x580] sm:$0xff]
                %2310 = vst [vmem:[%s1956 + $0xb00] sm:$0xff] %v2309
                %v2311 = vld [vmem:[%s1955 + $0x588] sm:$0xff]
                %2312 = vst [vmem:[%s1956 + $0xb08] sm:$0xff] %v2311
                %v2313 = vld [vmem:[%s1955 + $0x590] sm:$0xff]
                %2314 = vst [vmem:[%s1956 + $0xb10] sm:$0xff] %v2313
                %v2315 = vld [vmem:[%s1955 + $0x598] sm:$0xff]
                %2316 = vst [vmem:[%s1956 + $0xb18] sm:$0xff] %v2315
                %v2317 = vld [vmem:[%s1955 + $0x5a0] sm:$0xff]
                %2318 = vst [vmem:[%s1956 + $0xb20] sm:$0xff] %v2317
                %v2319 = vld [vmem:[%s1955 + $0x5a8] sm:$0xff]
                %2320 = vst [vmem:[%s1956 + $0xb28] sm:$0xff] %v2319
                %v2321 = vld [vmem:[%s1955 + $0x5b0] sm:$0xff]
                %2322 = vst [vmem:[%s1956 + $0xb30] sm:$0xff] %v2321
                %v2323 = vld [vmem:[%s1955 + $0x5b8] sm:$0xff]
                %2324 = vst [vmem:[%s1956 + $0xb38] sm:$0xff] %v2323
                %v2325 = vld [vmem:[%s1955 + $0x5c0] sm:$0xff]
                %2326 = vst [vmem:[%s1956 + $0xb40] sm:$0xff] %v2325
                %v2327 = vld [vmem:[%s1955 + $0x5c8] sm:$0xff]
                %2328 = vst [vmem:[%s1956 + $0xb48] sm:$0xff] %v2327
                %v2329 = vld [vmem:[%s1955 + $0x5d0] sm:$0xff]
                %2330 = vst [vmem:[%s1956 + $0xb50] sm:$0xff] %v2329
                %v2331 = vld [vmem:[%s1955 + $0x5d8] sm:$0xff]
                %2332 = vst [vmem:[%s1956 + $0xb58] sm:$0xff] %v2331
                %v2333 = vld [vmem:[%s1955 + $0x5e0] sm:$0xff]
                %2334 = vst [vmem:[%s1956 + $0xb60] sm:$0xff] %v2333
                %v2335 = vld [vmem:[%s1955 + $0x5e8] sm:$0xff]
                %2336 = vst [vmem:[%s1956 + $0xb68] sm:$0xff] %v2335
                %v2337 = vld [vmem:[%s1955 + $0x5f0] sm:$0xff]
                %2338 = vst [vmem:[%s1956 + $0xb70] sm:$0xff] %v2337
                %v2339 = vld [vmem:[%s1955 + $0x5f8] sm:$0xff]
                %2340 = vst [vmem:[%s1956 + $0xb78] sm:$0xff] %v2339
                %v2341 = vld [vmem:[%s1955 + $0x600] sm:$0xff]
                %2342 = vst [vmem:[%s1956 + $0xc00] sm:$0xff] %v2341
                %v2343 = vld [vmem:[%s1955 + $0x608] sm:$0xff]
                %2344 = vst [vmem:[%s1956 + $0xc08] sm:$0xff] %v2343
                %v2345 = vld [vmem:[%s1955 + $0x610] sm:$0xff]
                %2346 = vst [vmem:[%s1956 + $0xc10] sm:$0xff] %v2345
                %v2347 = vld [vmem:[%s1955 + $0x618] sm:$0xff]
                %2348 = vst [vmem:[%s1956 + $0xc18] sm:$0xff] %v2347
                %v2349 = vld [vmem:[%s1955 + $0x620] sm:$0xff]
                %2350 = vst [vmem:[%s1956 + $0xc20] sm:$0xff] %v2349
                %v2351 = vld [vmem:[%s1955 + $0x628] sm:$0xff]
                %2352 = vst [vmem:[%s1956 + $0xc28] sm:$0xff] %v2351
                %v2353 = vld [vmem:[%s1955 + $0x630] sm:$0xff]
                %2354 = vst [vmem:[%s1956 + $0xc30] sm:$0xff] %v2353
                %v2355 = vld [vmem:[%s1955 + $0x638] sm:$0xff]
                %2356 = vst [vmem:[%s1956 + $0xc38] sm:$0xff] %v2355
                %v2357 = vld [vmem:[%s1955 + $0x640] sm:$0xff]
                %2358 = vst [vmem:[%s1956 + $0xc40] sm:$0xff] %v2357
                %v2359 = vld [vmem:[%s1955 + $0x648] sm:$0xff]
                %2360 = vst [vmem:[%s1956 + $0xc48] sm:$0xff] %v2359
                %v2361 = vld [vmem:[%s1955 + $0x650] sm:$0xff]
                %2362 = vst [vmem:[%s1956 + $0xc50] sm:$0xff] %v2361
                %v2363 = vld [vmem:[%s1955 + $0x658] sm:$0xff]
                %2364 = vst [vmem:[%s1956 + $0xc58] sm:$0xff] %v2363
                %v2365 = vld [vmem:[%s1955 + $0x660] sm:$0xff]
                %2366 = vst [vmem:[%s1956 + $0xc60] sm:$0xff] %v2365
                %v2367 = vld [vmem:[%s1955 + $0x668] sm:$0xff]
                %2368 = vst [vmem:[%s1956 + $0xc68] sm:$0xff] %v2367
                %v2369 = vld [vmem:[%s1955 + $0x670] sm:$0xff]
                %2370 = vst [vmem:[%s1956 + $0xc70] sm:$0xff] %v2369
                %v2371 = vld [vmem:[%s1955 + $0x678] sm:$0xff]
                %2372 = vst [vmem:[%s1956 + $0xc78] sm:$0xff] %v2371
                %v2373 = vld [vmem:[%s1955 + $0x680] sm:$0xff]
                %2374 = vst [vmem:[%s1956 + $0xd00] sm:$0xff] %v2373
                %v2375 = vld [vmem:[%s1955 + $0x688] sm:$0xff]
                %2376 = vst [vmem:[%s1956 + $0xd08] sm:$0xff] %v2375
                %v2377 = vld [vmem:[%s1955 + $0x690] sm:$0xff]
                %2378 = vst [vmem:[%s1956 + $0xd10] sm:$0xff] %v2377
                %v2379 = vld [vmem:[%s1955 + $0x698] sm:$0xff]
                %2380 = vst [vmem:[%s1956 + $0xd18] sm:$0xff] %v2379
                %v2381 = vld [vmem:[%s1955 + $0x6a0] sm:$0xff]
                %2382 = vst [vmem:[%s1956 + $0xd20] sm:$0xff] %v2381
                %v2383 = vld [vmem:[%s1955 + $0x6a8] sm:$0xff]
                %2384 = vst [vmem:[%s1956 + $0xd28] sm:$0xff] %v2383
                %v2385 = vld [vmem:[%s1955 + $0x6b0] sm:$0xff]
                %2386 = vst [vmem:[%s1956 + $0xd30] sm:$0xff] %v2385
                %v2387 = vld [vmem:[%s1955 + $0x6b8] sm:$0xff]
                %2388 = vst [vmem:[%s1956 + $0xd38] sm:$0xff] %v2387
                %v2389 = vld [vmem:[%s1955 + $0x6c0] sm:$0xff]
                %2390 = vst [vmem:[%s1956 + $0xd40] sm:$0xff] %v2389
                %v2391 = vld [vmem:[%s1955 + $0x6c8] sm:$0xff]
                %2392 = vst [vmem:[%s1956 + $0xd48] sm:$0xff] %v2391
                %v2393 = vld [vmem:[%s1955 + $0x6d0] sm:$0xff]
                %2394 = vst [vmem:[%s1956 + $0xd50] sm:$0xff] %v2393
                %v2395 = vld [vmem:[%s1955 + $0x6d8] sm:$0xff]
                %2396 = vst [vmem:[%s1956 + $0xd58] sm:$0xff] %v2395
                %v2397 = vld [vmem:[%s1955 + $0x6e0] sm:$0xff]
                %2398 = vst [vmem:[%s1956 + $0xd60] sm:$0xff] %v2397
                %v2399 = vld [vmem:[%s1955 + $0x6e8] sm:$0xff]
                %2400 = vst [vmem:[%s1956 + $0xd68] sm:$0xff] %v2399
                %v2401 = vld [vmem:[%s1955 + $0x6f0] sm:$0xff]
                %2402 = vst [vmem:[%s1956 + $0xd70] sm:$0xff] %v2401
                %v2403 = vld [vmem:[%s1955 + $0x6f8] sm:$0xff]
                %2404 = vst [vmem:[%s1956 + $0xd78] sm:$0xff] %v2403
                %v2405 = vld [vmem:[%s1955 + $0x700] sm:$0xff]
                %2406 = vst [vmem:[%s1956 + $0xe00] sm:$0xff] %v2405
                %v2407 = vld [vmem:[%s1955 + $0x708] sm:$0xff]
                %2408 = vst [vmem:[%s1956 + $0xe08] sm:$0xff] %v2407
                %v2409 = vld [vmem:[%s1955 + $0x710] sm:$0xff]
                %2410 = vst [vmem:[%s1956 + $0xe10] sm:$0xff] %v2409
                %v2411 = vld [vmem:[%s1955 + $0x718] sm:$0xff]
                %2412 = vst [vmem:[%s1956 + $0xe18] sm:$0xff] %v2411
                %v2413 = vld [vmem:[%s1955 + $0x720] sm:$0xff]
                %2414 = vst [vmem:[%s1956 + $0xe20] sm:$0xff] %v2413
                %v2415 = vld [vmem:[%s1955 + $0x728] sm:$0xff]
                %2416 = vst [vmem:[%s1956 + $0xe28] sm:$0xff] %v2415
                %v2417 = vld [vmem:[%s1955 + $0x730] sm:$0xff]
                %2418 = vst [vmem:[%s1956 + $0xe30] sm:$0xff] %v2417
                %v2419 = vld [vmem:[%s1955 + $0x738] sm:$0xff]
                %2420 = vst [vmem:[%s1956 + $0xe38] sm:$0xff] %v2419
                %v2421 = vld [vmem:[%s1955 + $0x740] sm:$0xff]
                %2422 = vst [vmem:[%s1956 + $0xe40] sm:$0xff] %v2421
                %v2423 = vld [vmem:[%s1955 + $0x748] sm:$0xff]
                %2424 = vst [vmem:[%s1956 + $0xe48] sm:$0xff] %v2423
                %v2425 = vld [vmem:[%s1955 + $0x750] sm:$0xff]
                %2426 = vst [vmem:[%s1956 + $0xe50] sm:$0xff] %v2425
                %v2427 = vld [vmem:[%s1955 + $0x758] sm:$0xff]
                %2428 = vst [vmem:[%s1956 + $0xe58] sm:$0xff] %v2427
                %v2429 = vld [vmem:[%s1955 + $0x760] sm:$0xff]
                %2430 = vst [vmem:[%s1956 + $0xe60] sm:$0xff] %v2429
                %v2431 = vld [vmem:[%s1955 + $0x768] sm:$0xff]
                %2432 = vst [vmem:[%s1956 + $0xe68] sm:$0xff] %v2431
                %v2433 = vld [vmem:[%s1955 + $0x770] sm:$0xff]
                %2434 = vst [vmem:[%s1956 + $0xe70] sm:$0xff] %v2433
                %v2435 = vld [vmem:[%s1955 + $0x778] sm:$0xff]
                %2436 = vst [vmem:[%s1956 + $0xe78] sm:$0xff] %v2435
                %v2437 = vld [vmem:[%s1955 + $0x780] sm:$0xff]
                %2438 = vst [vmem:[%s1956 + $0xf00] sm:$0xff] %v2437
                %v2439 = vld [vmem:[%s1955 + $0x788] sm:$0xff]
                %2440 = vst [vmem:[%s1956 + $0xf08] sm:$0xff] %v2439
                %v2441 = vld [vmem:[%s1955 + $0x790] sm:$0xff]
                %2442 = vst [vmem:[%s1956 + $0xf10] sm:$0xff] %v2441
                %v2443 = vld [vmem:[%s1955 + $0x798] sm:$0xff]
                %2444 = vst [vmem:[%s1956 + $0xf18] sm:$0xff] %v2443
                %v2445 = vld [vmem:[%s1955 + $0x7a0] sm:$0xff]
                %2446 = vst [vmem:[%s1956 + $0xf20] sm:$0xff] %v2445
                %v2447 = vld [vmem:[%s1955 + $0x7a8] sm:$0xff]
                %2448 = vst [vmem:[%s1956 + $0xf28] sm:$0xff] %v2447
                %v2449 = vld [vmem:[%s1955 + $0x7b0] sm:$0xff]
                %2450 = vst [vmem:[%s1956 + $0xf30] sm:$0xff] %v2449
                %v2451 = vld [vmem:[%s1955 + $0x7b8] sm:$0xff]
                %2452 = vst [vmem:[%s1956 + $0xf38] sm:$0xff] %v2451
                %v2453 = vld [vmem:[%s1955 + $0x7c0] sm:$0xff]
                %2454 = vst [vmem:[%s1956 + $0xf40] sm:$0xff] %v2453
                %v2455 = vld [vmem:[%s1955 + $0x7c8] sm:$0xff]
                %2456 = vst [vmem:[%s1956 + $0xf48] sm:$0xff] %v2455
                %v2457 = vld [vmem:[%s1955 + $0x7d0] sm:$0xff]
                %2458 = vst [vmem:[%s1956 + $0xf50] sm:$0xff] %v2457
                %v2459 = vld [vmem:[%s1955 + $0x7d8] sm:$0xff]
                %2460 = vst [vmem:[%s1956 + $0xf58] sm:$0xff] %v2459
                %v2461 = vld [vmem:[%s1955 + $0x7e0] sm:$0xff]
                %2462 = vst [vmem:[%s1956 + $0xf60] sm:$0xff] %v2461
                %v2463 = vld [vmem:[%s1955 + $0x7e8] sm:$0xff]
                %2464 = vst [vmem:[%s1956 + $0xf68] sm:$0xff] %v2463
                %v2465 = vld [vmem:[%s1955 + $0x7f0] sm:$0xff]
                %2466 = vst [vmem:[%s1956 + $0xf70] sm:$0xff] %v2465
                %v2467 = vld [vmem:[%s1955 + $0x7f8] sm:$0xff]
                %2468 = vst [vmem:[%s1956 + $0xf78] sm:$0xff] %v2467
              $region72: #{deconv2x2x2_relu.1} parent=66 // loop_footer
                %s1954 = sadd.s32 1, %s1950
              $region73: #{deconv2x2x2_relu.1} parent=66 // loop_footer_branch
                %1949 = sbr.rel target = $region69
              $region74: #{deconv2x2x2_relu.1} parent=66 // loop_exit
                _
            $region67: #{deconv2x2x2_relu.1} parent=62 // pred_fallthru
              _
            // Predicated region
            $region75: #{deconv2x2x2_relu.1} parent=62 // pred_check
              _
            $region76: #{deconv2x2x2_relu.1} parent=62 // pred_check_branch
              %2470 = sbr.rel target = $region78
            $region77: #{deconv2x2x2_relu.1} parent=62 // pred_region
              _
            $region78: #{deconv2x2x2_relu.1} parent=62 // pred_fallthru
              _
          $region63: #{deconv2x2x2_relu.1} parent=58 // pred_fallthru
            _
          %2471 = vnop
        $region59: #{deconv2x2x2_relu.1} parent=50 // pred_fallthru
          _
      $region51: #{deconv2x2x2_relu.1} parent=5 // pred_fallthru
        _
      %p2472 = scmp.le.s32.totalorder 2, %s9
      // Predicated region
      $region79: #{deconv2x2x2_relu.1} parent=5 // pred_check
        %p2473 = pneg %p2472
      $region80: #{deconv2x2x2_relu.1} parent=5 // pred_check_branch
        %2475 = sbr.rel (%p2473) target = $region82
      $region81: #{deconv2x2x2_relu.1} parent=5 // pred_region
        %s2476 = ssub.s32 %s9, 2
        // Predicated region
        $region83: #{deconv2x2x2_relu.1} parent=81 // pred_check
          %p2477 = pneg %p122
        $region84: #{deconv2x2x2_relu.1} parent=81 // pred_check_branch
          %2479 = sbr.rel (%p2477) target = $region86
        $region85: #{deconv2x2x2_relu.1} parent=81 // pred_region
          %s2480 = sand.u32 %s107, 1
          %s2481 = sand.u32 %s107, 1
          %s2482 = smul.addr %s2481, 2048
          %s2483 = scalar_lea.vmem [#allocation3], %s2482
        $region86: #{deconv2x2x2_relu.1} parent=81 // pred_fallthru
          _
      $region82: #{deconv2x2x2_relu.1} parent=5 // pred_fallthru
        _
    $region6: #{deconv2x2x2_relu.1} parent=1 // loop_footer
      %s13 = sadd.s32 1, %s9
    $region7: #{deconv2x2x2_relu.1} parent=1 // loop_footer_branch
      %8 = sbr.rel target = $region3
    $region8: #{deconv2x2x2_relu.1} parent=1 // loop_exit
      _

</llo_original>
